<compile_context>
chip_gen: v7x
topology: tpu7x:2x2x1
jax: 0.10.0
libtpu: 0.0.40
codegen_flags: <defaults>
</compile_context>

<pallas_src>
import jax
import jax.numpy as jnp
import numpy as np
from jax import lax
from jax.experimental import pallas as pl
from jax.experimental.pallas import tpu as pltpu


def _dwsep_kernel(xm_ref, xh_ref, s_ref, wdc_ref, wpt_ref, b_ref, o_ref):
    # Block shapes (TH = output rows per tile, Wo = output cols, R = 2*TH):
    #   xm_ref  : (1, Cin, 2*TH, W)  input rows [2*TH*t, 2*TH*(t+1))
    #   xh_ref  : (1, Cin, 8, W)     8-row block whose LAST row is input row 2*TH*t - 1
    #   s_ref   : (W, 3*Wo)          0/1 width-tap gather matrix (kw groups of Wo lanes)
    #   wdc_ref : (3, Cin, 1, 3*Wo)  depthwise weights (BN1 folded), one slab per kh,
    #                                kw laid out along the 3*Wo lane groups
    #   wpt_ref : (Cout, Cin)        pointwise weights^T (BN2 folded)
    #   b_ref   : (Cout, 1)          fused output bias
    #   o_ref   : (1, Cout, TH*Wo)   lane-dense NCHW output block
    Cin, R, W = xm_ref.shape[1], xm_ref.shape[2], xm_ref.shape[3]
    TH = R // 2
    Wo3 = s_ref.shape[1]
    Wo = Wo3 // 3
    Cout, TW = o_ref.shape[1], o_ref.shape[2]

    # Width-tap gather on the MXU: for every loaded row produce the 3 stride-2 column
    # taps (kw = 0/1/2) as three Wo-wide lane groups. The kw=0 group already contains
    # the zero left-padding column (that column of S has no 1).
    xm = xm_ref[0].astype(jnp.float32).reshape(Cin * R, W)
    g = jnp.dot(xm, s_ref[...], preferred_element_type=jnp.float32)     # (Cin*R, 3*Wo)
    g = g.reshape(Cin, TH, 2, Wo3)
    ev = g[:, :, 0, :]                 # even rows: kh=1 (centre) taps for local row i
    od = g[:, :, 1, :]                 # odd rows : kh=2 taps for row i / kh=0 for i+1

    # Halo row (input row 2*TH*t - 1) supplies the kh=0 taps of the tile's first row.
    # For the first row tile it stands in for the zero top-padding row -> masked.
    hrow = xh_ref[0, :, 7, :].astype(jnp.float32)                        # (Cin, W)
    gh = jnp.dot(hrow, s_ref[...], preferred_element_type=jnp.float32)   # (Cin, 3*Wo)
    gh = gh * jnp.where(pl.program_id(1) == 0, 0.0, 1.0)

    if TH > 1:
        up = jnp.concatenate([gh[:, None, :], od[:, :TH - 1, :]], axis=1)
    else:
        up = gh[:, None, :]

    # Depthwise 3x3 (BN1 folded): each per-kh weight slab carries both the kh and kw
    # factors; then the three kw lane groups are summed.
    d3 = up * wdc_ref[0] + ev * wdc_ref[1] + od * wdc_ref[2]             # (Cin, TH, 3*Wo)
    dw = d3[:, :, :Wo] + d3[:, :, Wo:2 * Wo] + d3[:, :, 2 * Wo:]         # (Cin, TH, Wo)

    # Pointwise 1x1 conv on the MXU, lane-dense (Cout, TH*Wo) result, fused bias+ReLU.
    dw2 = dw.reshape(Cin, TH * Wo)
    out = jnp.dot(wpt_ref[...], dw2, preferred_element_type=jnp.float32)
    out = jnp.maximum(out + b_ref[...], 0.0)
    o_ref[...] = out.reshape(1, Cout, TW).astype(o_ref.dtype)


def fold_params(params):
    """Fold conv biases + both eval-mode BatchNorms into (wd_eff, wp_eff, bias)."""
    wd, bd, s1, b1 = params["wd"], params["bd"], params["s1"], params["b1"]
    wp, bp, s2, b2 = params["wp"], params["bp"], params["s2"], params["b2"]
    wd_eff = wd * s1[None, None, :]                    # (3, 3, Cin)
    wp_eff = wp * s2[None, :]                          # (Cin, Cout)
    bias = (bd * s1 + b1) @ wp_eff + (bp * s2 + b2)    # (Cout,)
    return wd_eff, wp_eff, bias


def _width_tap_matrix(W, Wo):
    """(W, 3*Wo) 0/1 matrix: column kw*Wo+w selects input column 2*w+kw-1 (0 if pad)."""
    s = np.zeros((W, 3 * Wo), np.float32)
    for kw in range(3):
        for w in range(Wo):
            src = 2 * w + kw - 1
            if 0 <= src < W:
                s[src, kw * Wo + w] = 1.0
    return jnp.asarray(s)


def _choose_row_tile(Ho, Wo, Cin, Cout, W, act_itemsize, budget_bytes):
    """Largest legal row tile whose double-buffered block set stays in the budget."""
    def legal(th):
        return th == Ho or (th % 4 == 0 and (th * Wo) % 128 == 0)

    def block_bytes(th):
        blk_in = Cin * 2 * th * W * act_itemsize
        halo = Cin * 8 * W * act_itemsize
        blk_out = Cout * th * Wo * 4
        # rough f32 live-value estimate (gathered taps, parity views, relayouts)
        live = 16 * Cin * th * 3 * Wo * 4 + 2 * Cout * th * Wo * 4
        return 2 * (blk_in + halo + blk_out) + live

    if block_bytes(Ho) <= budget_bytes:
        return Ho                                       # whole row range in one tile
    best = None
    for th in range(Ho - 1, 0, -1):
        if legal(th) and block_bytes(th) <= budget_bytes:
            if Ho % th == 0:
                return th                               # prefer no tail tile
            if best is None:
                best = th
    return best if best is not None else Ho


def depthwise_sep_conv(x_nchw, params, *, row_tile=None,
                       tile_budget_bytes=16 * 2**20,
                       vmem_limit_bytes=48 * 2**20):
    """Fused depthwise-3x3-s2 + BN + 1x1 + BN + ReLU. NCHW in -> NCHW out."""
    N, Cin, H, W = x_nchw.shape
    # This fused path implements exactly the module config: k=3, stride=2, pad=1.
    assert H % 2 == 0 and W % 2 == 0, "fused path assumes even H and W"
    assert H >= 8, "fused path assumes H >= 8 (8-row halo block)"
    Ho, Wo = H // 2, W // 2

    wd_eff, wp_eff, bias = fold_params(params)
    Cout = wp_eff.shape[1]

    if row_tile is None:
        TH = _choose_row_tile(Ho, Wo, Cin, Cout, W,
                              jnp.dtype(x_nchw.dtype).itemsize, tile_budget_bytes)
    else:
        TH = int(row_tile)
    assert 1 <= TH <= Ho and (TH == Ho or (TH % 4 == 0 and (TH * Wo) % 128 == 0)), (
        "row_tile must be Ho, or a multiple of 4 with row_tile*Wo a multiple of 128")
    n_tiles = pl.cdiv(Ho, TH)

    # Constants (built once, outside the kernel; broadcasts hoisted out of the loop).
    s_mat = _width_tap_matrix(W, Wo)                               # (W, 3*Wo)
    wdc = jnp.transpose(wd_eff, (0, 2, 1)).astype(jnp.float32)     # (3, Cin, 3) [kh,c,kw]
    wdc = jnp.repeat(wdc, Wo, axis=2).reshape(3, Cin, 1, 3 * Wo)   # kw -> Wo lane groups
    wpt = jnp.transpose(wp_eff).astype(jnp.float32)                # (Cout, Cin)
    b = bias.reshape(Cout, 1).astype(jnp.float32)

    th4 = TH // 4   # halo row 2*TH*t - 1 is the last row of 8-row block t*th4 - 1 (t>0)

    out_flat = pl.pallas_call(
        _dwsep_kernel,
        out_shape=jax.ShapeDtypeStruct((N, Cout, Ho * Wo), x_nchw.dtype),
        grid=(N, n_tiles),
        in_specs=[
            # main rows [2*TH*t, 2*TH*(t+1)) read straight from the NCHW input
            pl.BlockSpec((1, Cin, 2 * TH, W), lambda n, t: (n, 0, t, 0)),
            # 8-row halo block whose last row is input row 2*TH*t - 1 (clamped at t=0
            # and masked in-kernel: it stands in for the zero top-padding row)
            pl.BlockSpec((1, Cin, 8, W),
                         lambda n, t: (n, 0, jnp.maximum(t * th4 - 1, 0), 0)),
            pl.BlockSpec((W, 3 * Wo), lambda n, t: (0, 0)),
            pl.BlockSpec((3, Cin, 1, 3 * Wo), lambda n, t: (0, 0, 0, 0)),
            pl.BlockSpec((Cout, Cin), lambda n, t: (0, 0)),
            pl.BlockSpec((Cout, 1), lambda n, t: (0, 0)),
        ],
        out_specs=pl.BlockSpec((1, Cout, TH * Wo), lambda n, t: (n, 0, t)),
        compiler_params=pltpu.CompilerParams(
            dimension_semantics=("parallel", "parallel"),
            vmem_limit_bytes=vmem_limit_bytes,
        ),
    )(x_nchw, x_nchw, s_mat, wdc, wpt, b)

    # (N, Cout, Ho*Wo) -> (N, Cout, Ho, Wo): trivial minor-dim split, no data movement.
    return out_flat.reshape(N, Cout, Ho, Wo)


def init_params(key, in_ch, out_ch, eps=1e-5):
    ks = jax.random.split(key, 10)
    wd = 0.2 * jax.random.normal(ks[0], (3, 3, in_ch), jnp.float32)
    bd = 0.1 * jax.random.normal(ks[1], (in_ch,), jnp.float32)
    g1 = 1.0 + 0.1 * jax.random.normal(ks[2], (in_ch,), jnp.float32)
    be1 = 0.1 * jax.random.normal(ks[3], (in_ch,), jnp.float32)
    m1 = 0.1 * jax.random.normal(ks[4], (in_ch,), jnp.float32)
    v1 = jnp.abs(jax.random.normal(ks[5], (in_ch,), jnp.float32)) + 0.5
    wp = 0.3 * jax.random.normal(ks[6], (in_ch, out_ch), jnp.float32)
    bp = 0.1 * jax.random.normal(ks[7], (out_ch,), jnp.float32)
    g2 = 1.0 + 0.1 * jax.random.normal(ks[8], (out_ch,), jnp.float32)
    be2 = 0.1 * jax.random.normal(ks[9], (out_ch,), jnp.float32)
    m2 = jnp.zeros((out_ch,), jnp.float32)
    v2 = jnp.ones((out_ch,), jnp.float32)
    s1 = g1 / jnp.sqrt(v1 + eps); b1 = be1 - m1 * s1
    s2 = g2 / jnp.sqrt(v2 + eps); b2 = be2 - m2 * s2
    return dict(wd=wd, bd=bd, s1=s1, b1=b1, wp=wp, bp=bp, s2=s2, b2=b2)


def reference(x_nchw, params):
    """Unfused f32 reference (depthwise conv -> BN -> 1x1 conv -> BN -> ReLU)."""
    cin = x_nchw.shape[1]
    wd = jnp.transpose(params["wd"], (2, 0, 1))[:, None]        # (Cin,1,3,3) OIHW
    d = lax.conv_general_dilated(x_nchw, wd, (2, 2), ((1, 1), (1, 1)),
                                 feature_group_count=cin,
                                 dimension_numbers=("NCHW", "OIHW", "NCHW"))
    d = d + params["bd"].reshape(1, -1, 1, 1)
    d = d * params["s1"].reshape(1, -1, 1, 1) + params["b1"].reshape(1, -1, 1, 1)
    wp = jnp.transpose(params["wp"], (1, 0))[:, :, None, None]  # (Cout,Cin,1,1)
    p = lax.conv_general_dilated(d, wp, (1, 1), ((0, 0), (0, 0)),
                                 dimension_numbers=("NCHW", "OIHW", "NCHW"))
    p = p + params["bp"].reshape(1, -1, 1, 1)
    p = p * params["s2"].reshape(1, -1, 1, 1) + params["b2"].reshape(1, -1, 1, 1)
    return jnp.maximum(p, 0.0)


if __name__ == "__main__":
    key = jax.random.PRNGKey(0)
    kx, kp, kx2 = jax.random.split(key, 3)
    N, Cin, H, W, Cout = 2, 4, 16, 16, 8
    x = jax.random.normal(kx, (N, Cin, H, W), jnp.float32)
    params = init_params(kp, Cin, Cout)

    # Default path: single row tile per batch element (auto-chosen), f32 throughout.
    ref = jax.block_until_ready(reference(x, params))
    out = jax.block_until_ready(depthwise_sep_conv(x, params))
    assert out.shape == (N, Cout, H // 2, W // 2), out.shape
    np.testing.assert_allclose(np.asarray(out), np.asarray(ref), rtol=1e-4, atol=1e-4)

    # Multi-row-tile path: exercises the halo block and the top-padding mask across tiles.
    x2 = jax.random.normal(kx2, (1, Cin, 64, 64), jnp.float32)
    ref2 = jax.block_until_ready(reference(x2, params))
    out2 = jax.block_until_ready(depthwise_sep_conv(x2, params, row_tile=8))
    assert out2.shape == (1, Cout, 32, 32), out2.shape
    np.testing.assert_allclose(np.asarray(out2), np.asarray(ref2), rtol=1e-4, atol=1e-4)

    print("KERNEL_OK")
</pallas_src>

<mosaic_0001>
module attributes {stable_mosaic.version = 11 : i64} {
  func.func @_dwsep_kernel(%arg0: i32, %arg1: i32, %arg2: memref<1x4x16x16xf32, #tpu.memory_space<vmem>>, %arg3: memref<1x4x8x16xf32, #tpu.memory_space<vmem>>, %arg4: memref<16x24xf32, #tpu.memory_space<vmem>>, %arg5: memref<3x4x1x24xf32, #tpu.memory_space<vmem>>, %arg6: memref<8x4xf32, #tpu.memory_space<vmem>>, %arg7: memref<8x1xf32, #tpu.memory_space<vmem>>, %arg8: memref<1x8x64xf32, #tpu.memory_space<vmem>>) attributes {dimension_semantics = [#tpu.dimension_semantics<parallel>, #tpu.dimension_semantics<parallel>], iteration_bounds = array<i64: 2, 1>, scalar_prefetch = 0 : i64, scratch_operands = 0 : i64, tpu.core_type = #tpu.core_type<tc>, window_params = [{transform_indices = @transform_0, window_bounds = array<i64: 1, 4, 16, 16>}, {transform_indices = @transform_1, window_bounds = array<i64: 1, 4, 8, 16>}, {pipeline_mode = #tpu.pipeline_mode<synchronous>, transform_indices = @transform_2, window_bounds = array<i64: 16, 24>}, {pipeline_mode = #tpu.pipeline_mode<synchronous>, transform_indices = @transform_3, window_bounds = array<i64: 3, 4, 1, 24>}, {pipeline_mode = #tpu.pipeline_mode<synchronous>, transform_indices = @transform_4, window_bounds = array<i64: 8, 4>}, {pipeline_mode = #tpu.pipeline_mode<synchronous>, transform_indices = @transform_5, window_bounds = array<i64: 8, 1>}, {transform_indices = @transform_6, window_bounds = array<i64: 1, 8, 64>}]} {
    %c0 = arith.constant 0 : index
    %c0_0 = arith.constant 0 : index
    %c0_1 = arith.constant 0 : index
    %c0_2 = arith.constant 0 : index
    %0 = vector.load %arg2[%c0, %c0_0, %c0_1, %c0_2] : memref<1x4x16x16xf32, #tpu.memory_space<vmem>>, vector<1x4x16x16xf32>
    %1 = vector.shape_cast %0 : vector<1x4x16x16xf32> to vector<4x16x16xf32>
    %2 = vector.shape_cast %1 : vector<4x16x16xf32> to vector<64x16xf32>
    %c0_3 = arith.constant 0 : index
    %c0_4 = arith.constant 0 : index
    %3 = vector.load %arg4[%c0_3, %c0_4] : memref<16x24xf32, #tpu.memory_space<vmem>>, vector<16x24xf32>
    %cst = arith.constant dense<0.000000e+00> : vector<64x24xf32>
    %4 = tpu.matmul %2, %3, %cst {dimension_numbers = #tpu.dot_dimension_numbers<[1], [0], [0], [1], [0, 0, 1, 1], [], []>} : vector<64x16xf32>, vector<16x24xf32>, vector<64x24xf32> -> vector<64x24xf32>
    %5 = vector.shape_cast %4 : vector<64x24xf32> to vector<4x8x2x24xf32>
    %6 = vector.extract_strided_slice %5 {offsets = [0, 0, 0, 0], sizes = [4, 8, 1, 24], strides = [1, 1, 1, 1]} : vector<4x8x2x24xf32> to vector<4x8x1x24xf32>
    %7 = vector.shape_cast %6 : vector<4x8x1x24xf32> to vector<4x8x24xf32>
    %8 = vector.extract_strided_slice %5 {offsets = [0, 0, 1, 0], sizes = [4, 8, 1, 24], strides = [1, 1, 1, 1]} : vector<4x8x2x24xf32> to vector<4x8x1x24xf32>
    %9 = vector.shape_cast %8 : vector<4x8x1x24xf32> to vector<4x8x24xf32>
    %c0_5 = arith.constant 0 : index
    %c0_6 = arith.constant 0 : index
    %c7 = arith.constant 7 : index
    %c0_7 = arith.constant 0 : index
    %10 = vector.load %arg3[%c0_5, %c0_6, %c7, %c0_7] : memref<1x4x8x16xf32, #tpu.memory_space<vmem>>, vector<1x4x1x16xf32>
    %11 = vector.shape_cast %10 : vector<1x4x1x16xf32> to vector<4x16xf32>
    %c0_8 = arith.constant 0 : index
    %c0_9 = arith.constant 0 : index
    %12 = vector.load %arg4[%c0_8, %c0_9] : memref<16x24xf32, #tpu.memory_space<vmem>>, vector<16x24xf32>
    %cst_10 = arith.constant dense<0.000000e+00> : vector<4x24xf32>
    %13 = tpu.matmul %11, %12, %cst_10 {dimension_numbers = #tpu.dot_dimension_numbers<[1], [0], [0], [1], [0, 0, 1, 1], [], []>} : vector<4x16xf32>, vector<16x24xf32>, vector<4x24xf32> -> vector<4x24xf32>
    %c0_i32 = arith.constant 0 : i32
    %14 = arith.cmpi eq, %arg1, %c0_i32 : i32
    %cst_11 = arith.constant 0.000000e+00 : f32
    %cst_12 = arith.constant 1.000000e+00 : f32
    %15 = arith.select %14, %cst_11, %cst_12 : f32
    %16 = vector.broadcast %15 : f32 to vector<4x24xf32>
    %17 = arith.mulf %13, %16 : vector<4x24xf32>
    %18 = vector.shape_cast %17 : vector<4x24xf32> to vector<4x1x24xf32>
    %19 = vector.extract_strided_slice %9 {offsets = [0, 0, 0], sizes = [4, 7, 24], strides = [1, 1, 1]} : vector<4x8x24xf32> to vector<4x7x24xf32>
    %20 = tpu.concatenate %18, %19 in 1 : vector<4x1x24xf32>, vector<4x7x24xf32> -> vector<4x8x24xf32>
    %c0_13 = arith.constant 0 : index
    %c0_14 = arith.constant 0 : index
    %c0_15 = arith.constant 0 : index
    %c0_16 = arith.constant 0 : index
    %21 = vector.load %arg5[%c0_13, %c0_14, %c0_15, %c0_16] : memref<3x4x1x24xf32, #tpu.memory_space<vmem>>, vector<1x4x1x24xf32>
    %22 = vector.shape_cast %21 : vector<1x4x1x24xf32> to vector<4x1x24xf32>
    %23 = vector.broadcast %22 : vector<4x1x24xf32> to vector<4x8x24xf32>
    %24 = arith.mulf %20, %23 : vector<4x8x24xf32>
    %c1 = arith.constant 1 : index
    %c0_17 = arith.constant 0 : index
    %c0_18 = arith.constant 0 : index
    %c0_19 = arith.constant 0 : index
    %25 = vector.load %arg5[%c1, %c0_17, %c0_18, %c0_19] : memref<3x4x1x24xf32, #tpu.memory_space<vmem>>, vector<1x4x1x24xf32>
    %26 = vector.shape_cast %25 : vector<1x4x1x24xf32> to vector<4x1x24xf32>
    %27 = vector.broadcast %26 : vector<4x1x24xf32> to vector<4x8x24xf32>
    %28 = arith.mulf %7, %27 : vector<4x8x24xf32>
    %29 = arith.addf %24, %28 : vector<4x8x24xf32>
    %c2 = arith.constant 2 : index
    %c0_20 = arith.constant 0 : index
    %c0_21 = arith.constant 0 : index
    %c0_22 = arith.constant 0 : index
    %30 = vector.load %arg5[%c2, %c0_20, %c0_21, %c0_22] : memref<3x4x1x24xf32, #tpu.memory_space<vmem>>, vector<1x4x1x24xf32>
    %31 = vector.shape_cast %30 : vector<1x4x1x24xf32> to vector<4x1x24xf32>
    %32 = vector.broadcast %31 : vector<4x1x24xf32> to vector<4x8x24xf32>
    %33 = arith.mulf %9, %32 : vector<4x8x24xf32>
    %34 = arith.addf %29, %33 : vector<4x8x24xf32>
    %35 = vector.extract_strided_slice %34 {offsets = [0, 0, 0], sizes = [4, 8, 8], strides = [1, 1, 1]} : vector<4x8x24xf32> to vector<4x8x8xf32>
    %36 = vector.extract_strided_slice %34 {offsets = [0, 0, 8], sizes = [4, 8, 8], strides = [1, 1, 1]} : vector<4x8x24xf32> to vector<4x8x8xf32>
    %37 = arith.addf %35, %36 : vector<4x8x8xf32>
    %38 = vector.extract_strided_slice %34 {offsets = [0, 0, 16], sizes = [4, 8, 8], strides = [1, 1, 1]} : vector<4x8x24xf32> to vector<4x8x8xf32>
    %39 = arith.addf %37, %38 : vector<4x8x8xf32>
    %40 = vector.shape_cast %39 : vector<4x8x8xf32> to vector<4x64xf32>
    %c0_23 = arith.constant 0 : index
    %c0_24 = arith.constant 0 : index
    %41 = vector.load %arg6[%c0_23, %c0_24] : memref<8x4xf32, #tpu.memory_space<vmem>>, vector<8x4xf32>
    %cst_25 = arith.constant dense<0.000000e+00> : vector<8x64xf32>
    %42 = tpu.matmul %41, %40, %cst_25 {dimension_numbers = #tpu.dot_dimension_numbers<[1], [0], [0], [1], [0, 0, 1, 1], [], []>} : vector<8x4xf32>, vector<4x64xf32>, vector<8x64xf32> -> vector<8x64xf32>
    %c0_26 = arith.constant 0 : index
    %c0_27 = arith.constant 0 : index
    %43 = vector.load %arg7[%c0_26, %c0_27] : memref<8x1xf32, #tpu.memory_space<vmem>>, vector<8x1xf32>
    %44 = vector.broadcast %43 : vector<8x1xf32> to vector<8x64xf32>
    %45 = arith.addf %42, %44 : vector<8x64xf32>
    %cst_28 = arith.constant 0.000000e+00 : f32
    %46 = vector.broadcast %cst_28 : f32 to vector<8x64xf32>
    %47 = arith.maximumf %45, %46 : vector<8x64xf32>
    %48 = vector.shape_cast %47 : vector<8x64xf32> to vector<1x8x64xf32>
    %c0_29 = arith.constant 0 : index
    %c0_30 = arith.constant 0 : index
    %c0_31 = arith.constant 0 : index
    %49 = vector.load %arg8[%c0_29, %c0_30, %c0_31] : memref<1x8x64xf32, #tpu.memory_space<vmem>>, vector<1x8x64xf32>
    tpu.vector_store %arg8[%c0_29, %c0_30, %c0_31], %48 {strides = array<i32>} : memref<1x8x64xf32, #tpu.memory_space<vmem>>, vector<1x8x64xf32>,
    return
  }
  func.func @transform_0(%arg0: i32, %arg1: i32) -> (i32, i32, i32, i32) {
    %c0_i32 = arith.constant 0 : i32
    %c0_i32_0 = arith.constant 0 : i32
    %c0_i32_1 = arith.constant 0 : i32
    return %arg0, %c0_i32, %arg1, %c0_i32_0 : i32, i32, i32, i32
  }
  func.func @transform_1(%arg0: i32, %arg1: i32) -> (i32, i32, i32, i32) {
    %c2_i32 = arith.constant 2 : i32
    %0 = arith.muli %arg1, %c2_i32 : i32
    %c1_i32 = arith.constant 1 : i32
    %1 = arith.subi %0, %c1_i32 : i32
    %c0_i32 = arith.constant 0 : i32
    %2 = arith.maxsi %1, %c0_i32 : i32
    %c0_i32_0 = arith.constant 0 : i32
    %c0_i32_1 = arith.constant 0 : i32
    %c0_i32_2 = arith.constant 0 : i32
    return %arg0, %c0_i32_0, %2, %c0_i32_1 : i32, i32, i32, i32
  }
  func.func @transform_2(%arg0: i32, %arg1: i32) -> (i32, i32) {
    %c0_i32 = arith.constant 0 : i32
    %c0_i32_0 = arith.constant 0 : i32
    %c0_i32_1 = arith.constant 0 : i32
    return %c0_i32, %c0_i32_0 : i32, i32
  }
  func.func @transform_3(%arg0: i32, %arg1: i32) -> (i32, i32, i32, i32) {
    %c0_i32 = arith.constant 0 : i32
    %c0_i32_0 = arith.constant 0 : i32
    %c0_i32_1 = arith.constant 0 : i32
    %c0_i32_2 = arith.constant 0 : i32
    %c0_i32_3 = arith.constant 0 : i32
    return %c0_i32, %c0_i32_0, %c0_i32_1, %c0_i32_2 : i32, i32, i32, i32
  }
  func.func @transform_4(%arg0: i32, %arg1: i32) -> (i32, i32) {
    %c0_i32 = arith.constant 0 : i32
    %c0_i32_0 = arith.constant 0 : i32
    %c0_i32_1 = arith.constant 0 : i32
    return %c0_i32, %c0_i32_0 : i32, i32
  }
  func.func @transform_5(%arg0: i32, %arg1: i32) -> (i32, i32) {
    %c0_i32 = arith.constant 0 : i32
    %c0_i32_0 = arith.constant 0 : i32
    %c0_i32_1 = arith.constant 0 : i32
    return %c0_i32, %c0_i32_0 : i32, i32
  }
  func.func @transform_6(%arg0: i32, %arg1: i32) -> (i32, i32, i32) {
    %c0_i32 = arith.constant 0 : i32
    %c0_i32_0 = arith.constant 0 : i32
    return %arg0, %c0_i32, %arg1 : i32, i32, i32
  }
}

</mosaic_0001>

<llo_original>
// kernel: tpu_custom_call.1
$region0: #{tpu_custom_call.1}
  #allocation0 [shape = 'u32[]', space=smem, size = 0x4, offset = 0x4, fixed_abs, tag = 'smem constant byte address 0x4 - core index']
  #allocation1 [shape = 'u32[144,128]{1,0:T(1,128)}', space=vmem, size = 0x12000, scoped, tag = 'internal scratch']
  %s0 = inlined_call_operand.hbm [shape: f32[2,4,16,16], index: 0, kind: input, shape index: {}]
  %s1 = inlined_call_operand.hbm [shape: f32[2,4,16,16], index: 1, kind: input, shape index: {}]
  %s2 = inlined_call_operand.vmem [shape: f32[16,24], index: 2, kind: input, shape index: {}]
  %s3 = inlined_call_operand.vmem [shape: f32[3,4,1,24], index: 3, kind: input, shape index: {}]
  %s4 = inlined_call_operand.vmem [shape: f32[8,4], index: 4, kind: input, shape index: {}]
  %s5 = inlined_call_operand.vmem [shape: f32[8,1], index: 5, kind: input, shape index: {}]
  %s6 = inlined_call_operand.hbm [shape: f32[2,8,64], index: 6, kind: output, shape index: {}]
  %s7 = sld [smem:[#allocation0]]
  $region65: #{tpu_custom_call.1} parent=0
    _
  %s9 = ssub.s32 1, %s7
  %s10 = scalar_select 0, %s9, %s7
  $region1: #{tpu_custom_call.1} parent=0
    #allocation2 [shape = 'u8[65536]{0}', space=vmem, size = 0x10000, scoped, tag = 'input window, operand 0']
    #allocation3 [shape = 's32[2]{0}', space=sflag, size = 0x8, scoped, tag = 'scoped memory for tpu_custom_call.1']
    #allocation4 [shape = 's32[2]{0}', space=sflag, size = 0x8, scoped, tag = 'scoped memory for tpu_custom_call.1']
    #allocation5 [shape = 'u8[32768]{0}', space=vmem, size = 0x8000, scoped, tag = 'input window, operand 1']
    #allocation6 [shape = 's32[2]{0}', space=sflag, size = 0x8, scoped, tag = 'scoped memory for tpu_custom_call.1']
    #allocation7 [shape = 'u8[8192]{0}', space=vmem, size = 0x2000, scoped, tag = 'output window, operand 0']
    %11 = vsyncpa [#allocation3], 0
    %s12 = scalar_lea.sflag [#allocation3], 1
    %13 = vsyncpa %s12, 0
    %14 = vsyncpa [#allocation6], 0
    %s15 = scalar_lea.sflag [#allocation6], 1
    %16 = vsyncpa %s15, 0
    %17 = vsyncpa [#allocation4], 0
    %s18 = scalar_lea.sflag [#allocation4], 1
    %19 = vsyncpa %s18, 0
    loop: start=0, step=1, limit=4
    $region2: #{tpu_custom_call.1} parent=1 // loop_pre_header
      _
    $region3: #{tpu_custom_call.1} parent=1 // loop_header
      %s21 = sphi 0, %s25
      %p22 = scmp.ge.s32.totalorder %s21, 4
      %s28 = sphi 0, %s40
      %s29 = sphi 0, %s36
      %s30 = sphi 0, %s28
      %s31 = sphi 0, %s29
      %s32 = sphi 0, %s30
      %s33 = sphi 0, %s31
      %s45 = sphi 0, %s47
      %s48 = sphi 0, %s45
      %s49 = sphi 0, %s48
      %s65 = sphi 0, %s49
      %s81 = sphi 0, %s83
      %s84 = sphi 0, %s81
      %s85 = sphi 0, %s84
      %s101 = sphi 0, %s85
      %s105 = sphi 0, %s105
      %s107 = sphi 0, %s105
      %s108 = sphi 0, %s107
      %s122 = sphi 0, %s108
      %s126 = sphi 0, %s126
      %s128 = sphi 0, %s126
      %s129 = sphi 0, %s128
      %s143 = sphi 0, %s129
      %s147 = sphi 0, %s147
      %s149 = sphi 0, %s147
      %s150 = sphi 0, %s149
      %s164 = sphi 0, %s150
      %s168 = sphi 0, %s168
      %s170 = sphi 0, %s168
      %s171 = sphi 0, %s170
      %s185 = sphi 0, %s171
      %s193 = sphi 0, %s195
      %s196 = sphi 0, %s193
      %s197 = sphi 0, %s196
      %s213 = sphi 0, %s197
    $region4: #{tpu_custom_call.1} parent=1 // loop_header_branch
      %24 = sbr.rel (%p22) target = $region8
    $region5: #{tpu_custom_call.1} parent=1 // loop_body
      %s26 = ssub.s32 %s21, 1
      %s27 = ssub.s32 %s21, 2
      %s34 = sadd.s32 1, %s29
      %p35 = scmp.ge.s32.totalorder %s34, 1
      %s36 = scalar_select %p35, 0, %s34
      %s37 = sadd.s32 1, %s28
      %s38 = scalar_select %p35, %s37, %s28
      %p39 = scmp.ge.s32.totalorder %s38, 2
      %s40 = scalar_select %p39, 0, %s38
      %s41 = ssub.s32 %s28, %s40
      %s42 = ssub.s32 %s29, %s36
      %s43 = sor.u32 %s41, %s42
      %p44 = scmp.eq.s32.totalorder %s43, 0
      %s46 = sadd.s32 %s45, 1
      %s47 = scalar_select %p44, %s45, %s46
      %p50 = pneg %p44
      %p51 = scmp.eq.s32.totalorder %s21, 1
      %p52 = por %p50, %p51
      %p53 = scmp.ne.s32.totalorder %s45, %s48
      %p54 = scmp.eq.s32.totalorder %s21, 0
      %p55 = por %p53, %p54
      %p56 = scmp.ne.s32.totalorder %s45, %s48
      %p57 = scmp.eq.s32.totalorder %s26, 1
      %p58 = por %p56, %p57
      %p59 = scmp.ne.s32.totalorder %s48, %s49
      %p60 = scmp.eq.s32.totalorder %s26, 0
      %p61 = por %p59, %p60
      %p62 = scmp.ne.s32.totalorder %s48, %s49
      %p63 = scmp.eq.s32.totalorder %s27, 1
      %p64 = por %p62, %p63
      %p66 = scmp.ne.s32.totalorder %s49, %s65
      %p67 = scmp.eq.s32.totalorder %s27, 0
      %p68 = por %p66, %p67
      %s69 = smul.u32 %s29, 2
      %s70 = ssub.s32 %s69, 1
      %p71 = scmp.gt.s32.totalorder %s70, 0
      %s72 = scalar_select %p71, %s70, 0
      %s73 = smul.u32 %s36, 2
      %s74 = ssub.s32 %s73, 1
      %p75 = scmp.gt.s32.totalorder %s74, 0
      %s76 = scalar_select %p75, %s74, 0
      %s77 = ssub.s32 %s28, %s40
      %s78 = ssub.s32 %s72, %s76
      %s79 = sor.u32 %s77, %s78
      %p80 = scmp.eq.s32.totalorder %s79, 0
      %s82 = sadd.s32 %s81, 1
      %s83 = scalar_select %p80, %s81, %s82
      %p86 = pneg %p80
      %p87 = scmp.eq.s32.totalorder %s21, 1
      %p88 = por %p86, %p87
      %p89 = scmp.ne.s32.totalorder %s81, %s84
      %p90 = scmp.eq.s32.totalorder %s21, 0
      %p91 = por %p89, %p90
      %p92 = scmp.ne.s32.totalorder %s81, %s84
      %p93 = scmp.eq.s32.totalorder %s26, 1
      %p94 = por %p92, %p93
      %p95 = scmp.ne.s32.totalorder %s84, %s85
      %p96 = scmp.eq.s32.totalorder %s26, 0
      %p97 = por %p95, %p96
      %p98 = scmp.ne.s32.totalorder %s84, %s85
      %p99 = scmp.eq.s32.totalorder %s27, 1
      %p100 = por %p98, %p99
      %p102 = scmp.ne.s32.totalorder %s85, %s101
      %p103 = scmp.eq.s32.totalorder %s27, 0
      %p104 = por %p102, %p103
      %s106 = sadd.s32 %s105, 1
      %p109 = scmp.eq.s32.totalorder %s21, 1
      %p110 = scmp.ne.s32.totalorder %s105, %s107
      %p111 = scmp.eq.s32.totalorder %s21, 0
      %p112 = por %p110, %p111
      %p113 = scmp.ne.s32.totalorder %s105, %s107
      %p114 = scmp.eq.s32.totalorder %s26, 1
      %p115 = por %p113, %p114
      %p116 = scmp.ne.s32.totalorder %s107, %s108
      %p117 = scmp.eq.s32.totalorder %s26, 0
      %p118 = por %p116, %p117
      %p119 = scmp.ne.s32.totalorder %s107, %s108
      %p120 = scmp.eq.s32.totalorder %s27, 1
      %p121 = por %p119, %p120
      %p123 = scmp.ne.s32.totalorder %s108, %s122
      %p124 = scmp.eq.s32.totalorder %s27, 0
      %p125 = por %p123, %p124
      %s127 = sadd.s32 %s126, 1
      %p130 = scmp.eq.s32.totalorder %s21, 1
      %p131 = scmp.ne.s32.totalorder %s126, %s128
      %p132 = scmp.eq.s32.totalorder %s21, 0
      %p133 = por %p131, %p132
      %p134 = scmp.ne.s32.totalorder %s126, %s128
      %p135 = scmp.eq.s32.totalorder %s26, 1
      %p136 = por %p134, %p135
      %p137 = scmp.ne.s32.totalorder %s128, %s129
      %p138 = scmp.eq.s32.totalorder %s26, 0
      %p139 = por %p137, %p138
      %p140 = scmp.ne.s32.totalorder %s128, %s129
      %p141 = scmp.eq.s32.totalorder %s27, 1
      %p142 = por %p140, %p141
      %p144 = scmp.ne.s32.totalorder %s129, %s143
      %p145 = scmp.eq.s32.totalorder %s27, 0
      %p146 = por %p144, %p145
      %s148 = sadd.s32 %s147, 1
      %p151 = scmp.eq.s32.totalorder %s21, 1
      %p152 = scmp.ne.s32.totalorder %s147, %s149
      %p153 = scmp.eq.s32.totalorder %s21, 0
      %p154 = por %p152, %p153
      %p155 = scmp.ne.s32.totalorder %s147, %s149
      %p156 = scmp.eq.s32.totalorder %s26, 1
      %p157 = por %p155, %p156
      %p158 = scmp.ne.s32.totalorder %s149, %s150
      %p159 = scmp.eq.s32.totalorder %s26, 0
      %p160 = por %p158, %p159
      %p161 = scmp.ne.s32.totalorder %s149, %s150
      %p162 = scmp.eq.s32.totalorder %s27, 1
      %p163 = por %p161, %p162
      %p165 = scmp.ne.s32.totalorder %s150, %s164
      %p166 = scmp.eq.s32.totalorder %s27, 0
      %p167 = por %p165, %p166
      %s169 = sadd.s32 %s168, 1
      %p172 = scmp.eq.s32.totalorder %s21, 1
      %p173 = scmp.ne.s32.totalorder %s168, %s170
      %p174 = scmp.eq.s32.totalorder %s21, 0
      %p175 = por %p173, %p174
      %p176 = scmp.ne.s32.totalorder %s168, %s170
      %p177 = scmp.eq.s32.totalorder %s26, 1
      %p178 = por %p176, %p177
      %p179 = scmp.ne.s32.totalorder %s170, %s171
      %p180 = scmp.eq.s32.totalorder %s26, 0
      %p181 = por %p179, %p180
      %p182 = scmp.ne.s32.totalorder %s170, %s171
      %p183 = scmp.eq.s32.totalorder %s27, 1
      %p184 = por %p182, %p183
      %p186 = scmp.ne.s32.totalorder %s171, %s185
      %p187 = scmp.eq.s32.totalorder %s27, 0
      %p188 = por %p186, %p187
      %s189 = ssub.s32 %s28, %s40
      %s190 = ssub.s32 %s29, %s36
      %s191 = sor.u32 %s189, %s190
      %p192 = scmp.eq.s32.totalorder %s191, 0
      %s194 = sadd.s32 %s193, 1
      %s195 = scalar_select %p192, %s193, %s194
      %p198 = pneg %p192
      %p199 = scmp.eq.s32.totalorder %s21, 1
      %p200 = por %p198, %p199
      %p201 = scmp.ne.s32.totalorder %s193, %s196
      %p202 = scmp.eq.s32.totalorder %s21, 0
      %p203 = por %p201, %p202
      %p204 = scmp.ne.s32.totalorder %s193, %s196
      %p205 = scmp.eq.s32.totalorder %s26, 1
      %p206 = por %p204, %p205
      %p207 = scmp.ne.s32.totalorder %s196, %s197
      %p208 = scmp.eq.s32.totalorder %s26, 0
      %p209 = por %p207, %p208
      %p210 = scmp.ne.s32.totalorder %s196, %s197
      %p211 = scmp.eq.s32.totalorder %s27, 1
      %p212 = por %p210, %p211
      %p214 = scmp.ne.s32.totalorder %s197, %s213
      %p215 = scmp.eq.s32.totalorder %s27, 0
      %p216 = por %p214, %p215
      %p217 = scmp.le.s32.totalorder 1, %s21
      %p218 = scmp.lt.s32.totalorder %s21, 3
      %p219 = pnand %p217, %p218
      %p220 = pneg %p219
      // Predicated region
      $region9: #{tpu_custom_call.1} parent=5 // pred_check
        _
      $region10: #{tpu_custom_call.1} parent=5 // pred_check_branch
        %222 = sbr.rel (%p219) target = $region12
      $region11: #{tpu_custom_call.1} parent=5 // pred_region
        %s223 = ssub.s32 %s21, 1
        // Predicated region
        $region13: #{tpu_custom_call.1} parent=11 // pred_check
          %p224 = pneg %p118
        $region14: #{tpu_custom_call.1} parent=11 // pred_check_branch
          %226 = sbr.rel (%p224) target = $region16
        $region15: #{tpu_custom_call.1} parent=11 // pred_region
          _
        $region16: #{tpu_custom_call.1} parent=11 // pred_fallthru
          _
        // Predicated region
        $region17: #{tpu_custom_call.1} parent=11 // pred_check
          %p227 = pneg %p139
        $region18: #{tpu_custom_call.1} parent=11 // pred_check_branch
          %229 = sbr.rel (%p227) target = $region20
        $region19: #{tpu_custom_call.1} parent=11 // pred_region
          _
        $region20: #{tpu_custom_call.1} parent=11 // pred_fallthru
          _
        // Predicated region
        $region21: #{tpu_custom_call.1} parent=11 // pred_check
          %p230 = pneg %p160
        $region22: #{tpu_custom_call.1} parent=11 // pred_check_branch
          %232 = sbr.rel (%p230) target = $region24
        $region23: #{tpu_custom_call.1} parent=11 // pred_region
          _
        $region24: #{tpu_custom_call.1} parent=11 // pred_fallthru
          _
        // Predicated region
        $region25: #{tpu_custom_call.1} parent=11 // pred_check
          %p233 = pneg %p181
        $region26: #{tpu_custom_call.1} parent=11 // pred_check_branch
          %235 = sbr.rel (%p233) target = $region28
        $region27: #{tpu_custom_call.1} parent=11 // pred_region
          _
        $region28: #{tpu_custom_call.1} parent=11 // pred_fallthru
          _
      $region12: #{tpu_custom_call.1} parent=5 // pred_fallthru
        _
      %p236 = scmp.lt.s32.totalorder %s21, 2
      // Predicated region
      $region29: #{tpu_custom_call.1} parent=5 // pred_check
        %p237 = pneg %p236
      $region30: #{tpu_custom_call.1} parent=5 // pred_check_branch
        %239 = sbr.rel (%p237) target = $region32
      $region31: #{tpu_custom_call.1} parent=5 // pred_region
        // Predicated region
        $region33: #{tpu_custom_call.1} parent=31 // pred_check
          %p240 = pneg %p55
        $region34: #{tpu_custom_call.1} parent=31 // pred_check_branch
          %242 = sbr.rel (%p240) target = $region36
        $region35: #{tpu_custom_call.1} parent=31 // pred_region
          %s243 = sand.u32 %s45, 1
          %s244 = scalar_lea.sflag [#allocation3], %s243
          %s245 = sand.u32 %s45, 1
          %s246 = smul.addr %s245, 64
          %s247 = scalar_lea.vmem [#allocation2], %s246
          %s248 = smul.u32 2, %s29
          %s250 = ssub.s32 1024, 1024
          %251 = vsyncadd %s244, %s250
          %s252 = smul.addr %s28, 8
          %s253 = sadd.s32 %s248, %s252
          %s254 = smul.addr %s253, 128
          %s255 = scalar_lea.hbm %s0, %s254
          %s256 = sshll.u32 %s247, 4
          %s257 = int_to_ptr.vmem [resolvable:$true] %s256
          %262 = dma.hbm_to_vmem [thread:$0]  %s255, 1024, %s257, %s244, 128, 128, 8
        $region36: #{tpu_custom_call.1} parent=31 // pred_fallthru
          _
        // Predicated region
        $region37: #{tpu_custom_call.1} parent=31 // pred_check
          %p263 = pneg %p91
        $region38: #{tpu_custom_call.1} parent=31 // pred_check_branch
          %265 = sbr.rel (%p263) target = $region40
        $region39: #{tpu_custom_call.1} parent=31 // pred_region
          %s266 = sand.u32 %s81, 1
          %s267 = scalar_lea.sflag [#allocation6], %s266
          %s268 = sand.u32 %s81, 1
          %s269 = smul.addr %s268, 32
          %s270 = scalar_lea.vmem [#allocation5], %s269
          %s271 = smul.u32 %s29, 2
          %s272 = ssub.s32 %s271, 1
          %p273 = scmp.gt.s32.totalorder %s272, 0
          %s274 = scalar_select %p273, %s272, 0
          %s276 = ssub.s32 512, 512
          %277 = vsyncadd %s267, %s276
          %s278 = smul.addr %s28, 8
          %s279 = sadd.s32 %s274, %s278
          %s280 = smul.addr %s279, 128
          %s281 = scalar_lea.hbm %s1, %s280
          %s282 = sshll.u32 %s270, 4
          %s283 = int_to_ptr.vmem [resolvable:$true] %s282
          %288 = dma.hbm_to_vmem [thread:$0]  %s281, 512, %s283, %s267, 256, 128, 8
        $region40: #{tpu_custom_call.1} parent=31 // pred_fallthru
          _
      $region32: #{tpu_custom_call.1} parent=5 // pred_fallthru
        _
      %p289 = scmp.le.s32.totalorder 1, %s21
      %p290 = scmp.lt.s32.totalorder %s21, 3
      %p291 = pnand %p289, %p290
      %p292 = pneg %p291
      // Predicated region
      $region41: #{tpu_custom_call.1} parent=5 // pred_check
        _
      $region42: #{tpu_custom_call.1} parent=5 // pred_check_branch
        %294 = sbr.rel (%p291) target = $region44
      $region43: #{tpu_custom_call.1} parent=5 // pred_region
        %s295 = ssub.s32 %s21, 1
        %s296 = sand.u32 %s48, 1
        %s297 = scalar_lea.sflag [#allocation3], %s296
        %s298 = sand.u32 %s48, 1
        %s299 = smul.addr %s298, 64
        %s300 = scalar_lea.vmem [#allocation2], %s299
        // Predicated region
        $region45: #{tpu_custom_call.1} parent=43 // pred_check
          %p301 = pneg %p61
        $region46: #{tpu_custom_call.1} parent=43 // pred_check_branch
          %303 = sbr.rel (%p301) target = $region48
        $region47: #{tpu_custom_call.1} parent=43 // pred_region
          %304 = dma.done %s297, 1024
        $region48: #{tpu_custom_call.1} parent=43 // pred_fallthru
          _
        %s305 = sand.u32 %s84, 1
        %s306 = scalar_lea.sflag [#allocation6], %s305
        %s307 = sand.u32 %s84, 1
        %s308 = smul.addr %s307, 32
        %s309 = scalar_lea.vmem [#allocation5], %s308
        // Predicated region
        $region49: #{tpu_custom_call.1} parent=43 // pred_check
          %p310 = pneg %p97
        $region50: #{tpu_custom_call.1} parent=43 // pred_check_branch
          %312 = sbr.rel (%p310) target = $region52
        $region51: #{tpu_custom_call.1} parent=43 // pred_region
          %313 = dma.done %s306, 512
        $region52: #{tpu_custom_call.1} parent=43 // pred_fallthru
          _
        %s314 = sand.u32 %s48, 1
        %s315 = scalar_lea.sflag [#allocation3], %s314
        %s316 = sand.u32 %s48, 1
        %s317 = smul.addr %s316, 64
        %s318 = scalar_lea.vmem [#allocation2], %s317
        %p319 = pneg %p61
        %p320 = pneg %p58
        %s321 = sand.u32 %s84, 1
        %s322 = scalar_lea.sflag [#allocation6], %s321
        %s323 = sand.u32 %s84, 1
        %s324 = smul.addr %s323, 32
        %s325 = scalar_lea.vmem [#allocation5], %s324
        %p326 = pneg %p97
        %p327 = pneg %p94
        %p328 = pneg %p118
        %p329 = pneg %p115
        %p330 = pneg %p139
        %p331 = pneg %p136
        %p332 = pneg %p160
        %p333 = pneg %p157
        %p334 = pneg %p181
        %p335 = pneg %p178
        %p336 = pneg %p209
        %p337 = pneg %p206
        %s338 = sand.u32 %s196, 1
        %s339 = scalar_lea.sflag [#allocation4], %s338
        %s340 = sand.u32 %s196, 1
        %s341 = smul.addr %s340, 8
        %s342 = scalar_lea.vmem [#allocation7], %s341
        %s343 = smul.u32 2, %s31
        %s344 = smul.u32 %s31, 2
        %s345 = ssub.s32 %s344, 1
        %p346 = scmp.gt.s32.totalorder %s345, 0
        %s347 = scalar_select %p346, %s345, 0
        %v348 = vld [vmem:[%s300] sm:$0xff]
        %v349 = vld [vmem:[%s300 + $0x8] sm:$0xff]
        %v350 = vld [vmem:[%s300 + $0x10] sm:$0xff]
        %v351 = vld [vmem:[%s300 + $0x18] sm:$0xff]
        %v352 = vld [vmem:[%s300 + $0x20] sm:$0xff]
        %v353 = vld [vmem:[%s300 + $0x28] sm:$0xff]
        %v354 = vld [vmem:[%s300 + $0x30] sm:$0xff]
        %v355 = vld [vmem:[%s300 + $0x38] sm:$0xff]
        %v356 = vld [vmem:[%s2] sm:$0xff]
        %v357 = vld [vmem:[%s2 + $0x8] sm:$0xff]
        %vm358 = vcmask 130048
        %v360 = vsel %vm358, %v348, 0
        %v363 = vsel %vm358, %v349, 0
        %v366 = vsel %vm358, %v350, 0
        %v369 = vsel %vm358, %v351, 0
        %v372 = vsel %vm358, %v352, 0
        %v375 = vsel %vm358, %v353, 0
        %v378 = vsel %vm358, %v354, 0
        %v381 = vsel %vm358, %v355, 0
        %383 = vmatprep.subr.mxu0 0.0
        %384 = vmatpush1.msra.mxu0 %v356
        %385 = vmatprep.subr.mxu0 0.0
        %386 = vmatpush1.msra.mxu0 %v357
        %387 = vmatprep.subr.mxu0 0.0
        %388 = vmatpush1.msra.mxu0 0.0
        %389 = vmatprep.subr.mxu0 0.0
        %390 = vmatpush1.msra.mxu0 0.0
        %391 = vmatprep.subr.mxu0 0.0
        %392 = vmatpush1.msra.mxu0 0.0
        %393 = vmatprep.subr.mxu0 0.0
        %394 = vmatpush1.msra.mxu0 0.0
        %395 = vmatprep.subr.mxu0 0.0
        %396 = vmatpush1.msra.mxu0 0.0
        %397 = vmatprep.subr.mxu0 0.0
        %398 = vmatpush1.msra.mxu0 0.0
        %399 = vmatprep.subr.mxu0 0.0
        %400 = vmatpush1.msra.mxu0 0.0
        %401 = vmatprep.subr.mxu0 0.0
        %402 = vmatpush1.msra.mxu0 0.0
        %403 = vmatprep.subr.mxu0 0.0
        %404 = vmatpush1.msra.mxu0 0.0
        %405 = vmatprep.subr.mxu0 0.0
        %406 = vmatpush1.msra.mxu0 0.0
        %407 = vmatprep.subr.mxu0 0.0
        %408 = vmatpush1.msra.mxu0 0.0
        %409 = vmatprep.subr.mxu0 0.0
        %410 = vmatpush1.msra.mxu0 0.0
        %411 = vmatprep.subr.mxu0 0.0
        %412 = vmatpush1.msra.mxu0 0.0
        %413 = vmatprep.subr.mxu0 0.0
        %414 = vmatpush1.msra.mxu0 0.0
        %415 = vmatprep.subr.mxu0 0.0
        %416 = vmatpush1.msra.mxu0 0.0
        %417 = vmatprep.subr.mxu0 0.0
        %418 = vmatpush1.msra.mxu0 0.0
        %419 = vmatprep.subr.mxu0 0.0
        %420 = vmatpush1.msra.mxu0 0.0
        %421 = vmatprep.subr.mxu0 0.0
        %422 = vmatpush1.msra.mxu0 0.0
        %423 = vmatprep.subr.mxu0 0.0
        %424 = vmatpush1.msra.mxu0 0.0
        %425 = vmatprep.subr.mxu0 0.0
        %426 = vmatpush1.msra.mxu0 0.0
        %427 = vmatprep.subr.mxu0 0.0
        %428 = vmatpush1.msra.mxu0 0.0
        %429 = vmatprep.subr.mxu0 0.0
        %430 = vmatpush1.msra.mxu0 0.0
        %431 = vmatprep.subr.mxu0 0.0
        %432 = vmatpush1.msra.mxu0 0.0
        %433 = vmatprep.subr.mxu0 0.0
        %434 = vmatpush1.msra.mxu0 0.0
        %435 = vmatprep.subr.mxu0 0.0
        %436 = vmatpush1.msra.mxu0 0.0
        %437 = vmatprep.subr.mxu0 0.0
        %438 = vmatpush1.msra.mxu0 0.0
        %439 = vmatprep.subr.mxu0 0.0
        %440 = vmatpush1.msra.mxu0 0.0
        %441 = vmatprep.subr.mxu0 0.0
        %442 = vmatpush1.msra.mxu0 0.0
        %443 = vmatprep.subr.mxu0 0.0
        %444 = vmatpush1.msra.mxu0 0.0
        %445 = vmatprep.subr.mxu0 0.0
        %446 = vmatpush1.msra.mxu0 0.0
        %447 = vmatprep.mubr.f32.mxu0 0.0
        %448 = vmatmul.mubr.f32.gmra.mrb[0].mxu0 %v360
        %v449 = vpop.f32.mrb[0].mxu0
        %v450 = vadd.f32 0.0, %v449
        %v451 = vpop.f32.mrb[0].mxu0
        %452 = vmatprep.mubr.f32.mxu0 0.0
        %453 = vmatmul.mubr.f32.gmra.mrb[0].mxu0 %v363
        %v454 = vpop.f32.mrb[0].mxu0
        %v455 = vadd.f32 0.0, %v454
        %v456 = vpop.f32.mrb[0].mxu0
        %457 = vmatprep.mubr.f32.mxu0 0.0
        %458 = vmatmul.mubr.f32.gmra.mrb[0].mxu0 %v366
        %v459 = vpop.f32.mrb[0].mxu0
        %v460 = vadd.f32 0.0, %v459
        %v461 = vpop.f32.mrb[0].mxu0
        %462 = vmatprep.mubr.f32.mxu0 0.0
        %463 = vmatmul.mubr.f32.gmra.mrb[0].mxu0 %v369
        %v464 = vpop.f32.mrb[0].mxu0
        %v465 = vadd.f32 0.0, %v464
        %v466 = vpop.f32.mrb[0].mxu0
        %467 = vmatprep.mubr.f32.mxu0 0.0
        %468 = vmatmul.mubr.f32.gmra.mrb[0].mxu0 %v372
        %v469 = vpop.f32.mrb[0].mxu0
        %v470 = vadd.f32 0.0, %v469
        %v471 = vpop.f32.mrb[0].mxu0
        %472 = vmatprep.mubr.f32.mxu0 0.0
        %473 = vmatmul.mubr.f32.gmra.mrb[0].mxu0 %v375
        %v474 = vpop.f32.mrb[0].mxu0
        %v475 = vadd.f32 0.0, %v474
        %v476 = vpop.f32.mrb[0].mxu0
        %477 = vmatprep.mubr.f32.mxu0 0.0
        %478 = vmatmul.mubr.f32.gmra.mrb[0].mxu0 %v378
        %v479 = vpop.f32.mrb[0].mxu0
        %v480 = vadd.f32 0.0, %v479
        %v481 = vpop.f32.mrb[0].mxu0
        %482 = vmatprep.mubr.f32.mxu0 0.0
        %483 = vmatmul.mubr.f32.gmra.mrb[0].mxu0 %v381
        %v484 = vpop.f32.mrb[0].mxu0
        %v485 = vadd.f32 0.0, %v484
        %v486 = vpop.f32.mrb[0].mxu0
        %487 = vdwg.mxu0
        %v496 = vcombine.high %v450, %v450
        %v498 = vunpack.c.l.s4 1983009808
        %v499 = vunpack.c.0.s8 %v498
        %v500 = vlaneseq
        %v501 = vshrl.u32 %v500, 7
        %v502 = vsub.s32 %v499, %v501
        %v503 = vrot.slane %v450, %v502
        %v505 = vunpack.c.l.s4 1983009808
        %v506 = vunpack.c.0.s8 %v505
        %v507 = vlaneseq
        %v508 = vshrl.u32 %v507, 7
        %v509 = vsub.s32 %v506, %v508
        %v510 = vrot.slane %v496, %v509
        %v511 = vcombine.high %v503, %v503
        %v512 = vcombine.high %v510, %v510
        %v513 = vcombine.high %v455, %v455
        %v515 = vunpack.c.l.s4 1983009808
        %v516 = vunpack.c.0.s8 %v515
        %v517 = vlaneseq
        %v518 = vshrl.u32 %v517, 7
        %v519 = vsub.s32 %v516, %v518
        %v520 = vrot.slane %v455, %v519
        %v522 = vunpack.c.l.s4 1983009808
        %v523 = vunpack.c.0.s8 %v522
        %v524 = vlaneseq
        %v525 = vshrl.u32 %v524, 7
        %v526 = vsub.s32 %v523, %v525
        %v527 = vrot.slane %v513, %v526
        %v528 = vcombine.high %v520, %v520
        %v529 = vcombine.high %v527, %v527
        %v530 = vcombine.high %v460, %v460
        %v532 = vunpack.c.l.s4 1983009808
        %v533 = vunpack.c.0.s8 %v532
        %v534 = vlaneseq
        %v535 = vshrl.u32 %v534, 7
        %v536 = vsub.s32 %v533, %v535
        %v537 = vrot.slane %v460, %v536
        %v539 = vunpack.c.l.s4 1983009808
        %v540 = vunpack.c.0.s8 %v539
        %v541 = vlaneseq
        %v542 = vshrl.u32 %v541, 7
        %v543 = vsub.s32 %v540, %v542
        %v544 = vrot.slane %v530, %v543
        %v545 = vcombine.high %v537, %v537
        %v546 = vcombine.high %v544, %v544
        %v547 = vcombine.high %v465, %v465
        %v549 = vunpack.c.l.s4 1983009808
        %v550 = vunpack.c.0.s8 %v549
        %v551 = vlaneseq
        %v552 = vshrl.u32 %v551, 7
        %v553 = vsub.s32 %v550, %v552
        %v554 = vrot.slane %v465, %v553
        %v556 = vunpack.c.l.s4 1983009808
        %v557 = vunpack.c.0.s8 %v556
        %v558 = vlaneseq
        %v559 = vshrl.u32 %v558, 7
        %v560 = vsub.s32 %v557, %v559
        %v561 = vrot.slane %v547, %v560
        %v562 = vcombine.high %v554, %v554
        %v563 = vcombine.high %v561, %v561
        %v564 = vcombine.high %v470, %v470
        %v566 = vunpack.c.l.s4 1983009808
        %v567 = vunpack.c.0.s8 %v566
        %v568 = vlaneseq
        %v569 = vshrl.u32 %v568, 7
        %v570 = vsub.s32 %v567, %v569
        %v571 = vrot.slane %v470, %v570
        %v573 = vunpack.c.l.s4 1983009808
        %v574 = vunpack.c.0.s8 %v573
        %v575 = vlaneseq
        %v576 = vshrl.u32 %v575, 7
        %v577 = vsub.s32 %v574, %v576
        %v578 = vrot.slane %v564, %v577
        %v579 = vcombine.high %v571, %v571
        %v580 = vcombine.high %v578, %v578
        %v581 = vcombine.high %v475, %v475
        %v583 = vunpack.c.l.s4 1983009808
        %v584 = vunpack.c.0.s8 %v583
        %v585 = vlaneseq
        %v586 = vshrl.u32 %v585, 7
        %v587 = vsub.s32 %v584, %v586
        %v588 = vrot.slane %v475, %v587
        %v590 = vunpack.c.l.s4 1983009808
        %v591 = vunpack.c.0.s8 %v590
        %v592 = vlaneseq
        %v593 = vshrl.u32 %v592, 7
        %v594 = vsub.s32 %v591, %v593
        %v595 = vrot.slane %v581, %v594
        %v596 = vcombine.high %v588, %v588
        %v597 = vcombine.high %v595, %v595
        %v598 = vcombine.high %v480, %v480
        %v600 = vunpack.c.l.s4 1983009808
        %v601 = vunpack.c.0.s8 %v600
        %v602 = vlaneseq
        %v603 = vshrl.u32 %v602, 7
        %v604 = vsub.s32 %v601, %v603
        %v605 = vrot.slane %v480, %v604
        %v607 = vunpack.c.l.s4 1983009808
        %v608 = vunpack.c.0.s8 %v607
        %v609 = vlaneseq
        %v610 = vshrl.u32 %v609, 7
        %v611 = vsub.s32 %v608, %v610
        %v612 = vrot.slane %v598, %v611
        %v613 = vcombine.high %v605, %v605
        %v614 = vcombine.high %v612, %v612
        %v615 = vcombine.high %v485, %v485
        %v617 = vunpack.c.l.s4 1983009808
        %v618 = vunpack.c.0.s8 %v617
        %v619 = vlaneseq
        %v620 = vshrl.u32 %v619, 7
        %v621 = vsub.s32 %v618, %v620
        %v622 = vrot.slane %v485, %v621
        %v624 = vunpack.c.l.s4 1983009808
        %v625 = vunpack.c.0.s8 %v624
        %v626 = vlaneseq
        %v627 = vshrl.u32 %v626, 7
        %v628 = vsub.s32 %v625, %v627
        %v629 = vrot.slane %v615, %v628
        %v630 = vcombine.high %v622, %v622
        %v631 = vcombine.high %v629, %v629
        %v664 = vld [vmem:[%s309 + $0x7] sm:$0x1]
        %v665 = vld [vmem:[%s309 + $0xf] sm:$0x1]
        %v666 = vld [vmem:[%s309 + $0x17] sm:$0x1]
        %v667 = vld [vmem:[%s309 + $0x1f] sm:$0x1]
        %v672 = vrot.slane %v665, 7
        %vm673 = vcmask 1041409
        %v674 = vsel %vm673, %v672, %v664
        %v675 = vrot.slane %v666, 6
        %vm676 = vcmask 1042434
        %v677 = vsel %vm676, %v675, %v674
        %v678 = vrot.slane %v667, 5
        %vm679 = vcmask 1043459
        %v680 = vsel %vm679, %v678, %v677
        %v681 = vsel %vm358, %v680, 0
        %683 = vmatprep.subr.mxu0 0.0
        %684 = vmatpush1.msra.mxu0 %v356
        %685 = vmatprep.subr.mxu0 0.0
        %686 = vmatpush1.msra.mxu0 %v357
        %687 = vmatprep.subr.mxu0 0.0
        %688 = vmatpush1.msra.mxu0 0.0
        %689 = vmatprep.subr.mxu0 0.0
        %690 = vmatpush1.msra.mxu0 0.0
        %691 = vmatprep.subr.mxu0 0.0
        %692 = vmatpush1.msra.mxu0 0.0
        %693 = vmatprep.subr.mxu0 0.0
        %694 = vmatpush1.msra.mxu0 0.0
        %695 = vmatprep.subr.mxu0 0.0
        %696 = vmatpush1.msra.mxu0 0.0
        %697 = vmatprep.subr.mxu0 0.0
        %698 = vmatpush1.msra.mxu0 0.0
        %699 = vmatprep.subr.mxu0 0.0
        %700 = vmatpush1.msra.mxu0 0.0
        %701 = vmatprep.subr.mxu0 0.0
        %702 = vmatpush1.msra.mxu0 0.0
        %703 = vmatprep.subr.mxu0 0.0
        %704 = vmatpush1.msra.mxu0 0.0
        %705 = vmatprep.subr.mxu0 0.0
        %706 = vmatpush1.msra.mxu0 0.0
        %707 = vmatprep.subr.mxu0 0.0
        %708 = vmatpush1.msra.mxu0 0.0
        %709 = vmatprep.subr.mxu0 0.0
        %710 = vmatpush1.msra.mxu0 0.0
        %711 = vmatprep.subr.mxu0 0.0
        %712 = vmatpush1.msra.mxu0 0.0
        %713 = vmatprep.subr.mxu0 0.0
        %714 = vmatpush1.msra.mxu0 0.0
        %715 = vmatprep.subr.mxu0 0.0
        %716 = vmatpush1.msra.mxu0 0.0
        %717 = vmatprep.subr.mxu0 0.0
        %718 = vmatpush1.msra.mxu0 0.0
        %719 = vmatprep.subr.mxu0 0.0
        %720 = vmatpush1.msra.mxu0 0.0
        %721 = vmatprep.subr.mxu0 0.0
        %722 = vmatpush1.msra.mxu0 0.0
        %723 = vmatprep.subr.mxu0 0.0
        %724 = vmatpush1.msra.mxu0 0.0
        %725 = vmatprep.subr.mxu0 0.0
        %726 = vmatpush1.msra.mxu0 0.0
        %727 = vmatprep.subr.mxu0 0.0
        %728 = vmatpush1.msra.mxu0 0.0
        %729 = vmatprep.subr.mxu0 0.0
        %730 = vmatpush1.msra.mxu0 0.0
        %731 = vmatprep.subr.mxu0 0.0
        %732 = vmatpush1.msra.mxu0 0.0
        %733 = vmatprep.subr.mxu0 0.0
        %734 = vmatpush1.msra.mxu0 0.0
        %735 = vmatprep.subr.mxu0 0.0
        %736 = vmatpush1.msra.mxu0 0.0
        %737 = vmatprep.subr.mxu0 0.0
        %738 = vmatpush1.msra.mxu0 0.0
        %739 = vmatprep.subr.mxu0 0.0
        %740 = vmatpush1.msra.mxu0 0.0
        %741 = vmatprep.subr.mxu0 0.0
        %742 = vmatpush1.msra.mxu0 0.0
        %743 = vmatprep.subr.mxu0 0.0
        %744 = vmatpush1.msra.mxu0 0.0
        %745 = vmatprep.subr.mxu0 0.0
        %746 = vmatpush1.msra.mxu0 0.0
        %747 = vmatprep.mubr.f32.mxu0 0.0
        %748 = vmatmul.mubr.f32.gmra.mrb[0].mxu0 %v681
        %v749 = vpop.f32.mrb[0].mxu0
        %v750 = vadd.f32 0.0, %v749
        %v751 = vpop.f32.mrb[0].mxu0
        %752 = vdwg.mxu0
        %p753 = scmp.eq.s32.totalorder %s31, 0
        %s754 = scalar_select %p753, 0.0, 1.0
        %v755 = vstv %s754
        %v756 = vmul.f32 %v750, %v755
        %v759 = vunpack.c.l.s4 1966171168
        %v760 = vunpack.c.0.s8 %v759
        %v761 = vlaneseq
        %v762 = vshrl.u32 %v761, 7
        %v763 = vsub.s32 %v760, %v762
        %v764 = vrot.slane %v756, %v763
        %v765 = vcombine.high %v764, %v764
        %v767 = vunpack.c.l.s4 1966171168
        %v768 = vunpack.c.0.s8 %v767
        %v769 = vlaneseq
        %v770 = vshrl.u32 %v769, 7
        %v771 = vsub.s32 %v768, %v770
        %v772 = vrot.slane %v764, %v771
        %v774 = vunpack.c.l.s4 1966171168
        %v775 = vunpack.c.0.s8 %v774
        %v776 = vlaneseq
        %v777 = vshrl.u32 %v776, 7
        %v778 = vsub.s32 %v775, %v777
        %v779 = vrot.slane %v765, %v778
        %v780 = vcombine.high %v772, %v772
        %v781 = vcombine.high %v779, %v779
        %v786 = vlaneseq
        %v787 = vshrl.u32 %v786, 7
        %v788 = vsub.s32 1, %v787
        %v789 = vrot.slane %v503, %v788
        %v790 = vlaneseq
        %v791 = vshrl.u32 %v790, 7
        %v792 = vsub.s32 1, %v791
        %v793 = vrot.slane %v511, %v792
        %v794 = vlaneseq
        %v795 = vshrl.u32 %v794, 7
        %v796 = vsub.s32 1, %v795
        %v797 = vrot.slane %v510, %v796
        %v798 = vlaneseq
        %v799 = vshrl.u32 %v798, 7
        %v800 = vsub.s32 1, %v799
        %v801 = vrot.slane %v512, %v800
        %v802 = vlaneseq
        %v803 = vshrl.u32 %v802, 7
        %v804 = vsub.s32 1, %v803
        %v805 = vrot.slane %v520, %v804
        %v806 = vlaneseq
        %v807 = vshrl.u32 %v806, 7
        %v808 = vsub.s32 1, %v807
        %v809 = vrot.slane %v528, %v808
        %v810 = vlaneseq
        %v811 = vshrl.u32 %v810, 7
        %v812 = vsub.s32 1, %v811
        %v813 = vrot.slane %v527, %v812
        %v814 = vlaneseq
        %v815 = vshrl.u32 %v814, 7
        %v816 = vsub.s32 1, %v815
        %v817 = vrot.slane %v537, %v816
        %v818 = vlaneseq
        %v819 = vshrl.u32 %v818, 7
        %v820 = vsub.s32 1, %v819
        %v821 = vrot.slane %v545, %v820
        %v822 = vlaneseq
        %v823 = vshrl.u32 %v822, 7
        %v824 = vsub.s32 1, %v823
        %v825 = vrot.slane %v544, %v824
        %v826 = vlaneseq
        %v827 = vshrl.u32 %v826, 7
        %v828 = vsub.s32 1, %v827
        %v829 = vrot.slane %v546, %v828
        %v830 = vlaneseq
        %v831 = vshrl.u32 %v830, 7
        %v832 = vsub.s32 1, %v831
        %v833 = vrot.slane %v554, %v832
        %v834 = vlaneseq
        %v835 = vshrl.u32 %v834, 7
        %v836 = vsub.s32 1, %v835
        %v837 = vrot.slane %v562, %v836
        %v838 = vlaneseq
        %v839 = vshrl.u32 %v838, 7
        %v840 = vsub.s32 1, %v839
        %v841 = vrot.slane %v561, %v840
        %v842 = vlaneseq
        %v843 = vshrl.u32 %v842, 7
        %v844 = vsub.s32 1, %v843
        %v845 = vrot.slane %v571, %v844
        %v846 = vlaneseq
        %v847 = vshrl.u32 %v846, 7
        %v848 = vsub.s32 1, %v847
        %v849 = vrot.slane %v579, %v848
        %v850 = vlaneseq
        %v851 = vshrl.u32 %v850, 7
        %v852 = vsub.s32 1, %v851
        %v853 = vrot.slane %v578, %v852
        %v854 = vlaneseq
        %v855 = vshrl.u32 %v854, 7
        %v856 = vsub.s32 1, %v855
        %v857 = vrot.slane %v580, %v856
        %v858 = vlaneseq
        %v859 = vshrl.u32 %v858, 7
        %v860 = vsub.s32 1, %v859
        %v861 = vrot.slane %v588, %v860
        %v862 = vlaneseq
        %v863 = vshrl.u32 %v862, 7
        %v864 = vsub.s32 1, %v863
        %v865 = vrot.slane %v596, %v864
        %v866 = vlaneseq
        %v867 = vshrl.u32 %v866, 7
        %v868 = vsub.s32 1, %v867
        %v869 = vrot.slane %v595, %v868
        %v870 = vlaneseq
        %v871 = vshrl.u32 %v870, 7
        %v872 = vsub.s32 1, %v871
        %v873 = vrot.slane %v605, %v872
        %v874 = vlaneseq
        %v875 = vshrl.u32 %v874, 7
        %v876 = vsub.s32 1, %v875
        %v877 = vrot.slane %v613, %v876
        %v878 = vlaneseq
        %v879 = vshrl.u32 %v878, 7
        %v880 = vsub.s32 1, %v879
        %v881 = vrot.slane %v612, %v880
        %v882 = vlaneseq
        %v883 = vshrl.u32 %v882, 7
        %v884 = vsub.s32 1, %v883
        %v885 = vrot.slane %v614, %v884
        %v886 = vlaneseq
        %v887 = vshrl.u32 %v886, 7
        %v888 = vsub.s32 1, %v887
        %v889 = vrot.slane %v622, %v888
        %v890 = vlaneseq
        %v891 = vshrl.u32 %v890, 7
        %v892 = vsub.s32 1, %v891
        %v893 = vrot.slane %v630, %v892
        %v894 = vlaneseq
        %v895 = vshrl.u32 %v894, 7
        %v896 = vsub.s32 1, %v895
        %v897 = vrot.slane %v629, %v896
        %v898 = vsel %vm676, %v793, %v789
        %v899 = vsel %vm679, %v797, %v898
        %vm900 = vcmask 1044484
        %v901 = vsel %vm900, %v801, %v899
        %vm902 = vcmask 1045509
        %v903 = vsel %vm902, %v805, %v901
        %vm904 = vcmask 1046534
        %v905 = vsel %vm904, %v809, %v903
        %vm906 = vcmask 1047559
        %v907 = vsel %vm906, %v813, %v905
        %v908 = vsel %vm676, %v821, %v817
        %v909 = vsel %vm679, %v825, %v908
        %v910 = vsel %vm900, %v829, %v909
        %v911 = vsel %vm902, %v833, %v910
        %v912 = vsel %vm904, %v837, %v911
        %v913 = vsel %vm906, %v841, %v912
        %v914 = vsel %vm676, %v849, %v845
        %v915 = vsel %vm679, %v853, %v914
        %v916 = vsel %vm900, %v857, %v915
        %v917 = vsel %vm902, %v861, %v916
        %v918 = vsel %vm904, %v865, %v917
        %v919 = vsel %vm906, %v869, %v918
        %v920 = vsel %vm676, %v877, %v873
        %v921 = vsel %vm679, %v881, %v920
        %v922 = vsel %vm900, %v885, %v921
        %v923 = vsel %vm902, %v889, %v922
        %v924 = vsel %vm904, %v893, %v923
        %v925 = vsel %vm906, %v897, %v924
        %vm930 = vcmask 1040384
        %v931 = vsel %vm930, %v772, %v907
        %v932 = vsel %vm930, %v779, %v913
        %v933 = vsel %vm930, %v780, %v919
        %v934 = vsel %vm930, %v781, %v925
        %v935 = vld [vmem:[%s3] sm:$0x1]
        %v936 = vld [vmem:[%s3 + $0x1] sm:$0x1]
        %v937 = vld [vmem:[%s3 + $0x2] sm:$0x1]
        %v938 = vld [vmem:[%s3 + $0x3] sm:$0x1]
        %v943 = vlaneseq
        %v944 = vshrl.u32 %v943, 7
        %v945 = vsub.s32 0, %v944
        %v946 = vrot.slane %v935, %v945
        %v947 = vlaneseq
        %v948 = vshrl.u32 %v947, 7
        %v949 = vsub.s32 0, %v948
        %v950 = vrot.slane %v936, %v949
        %v951 = vlaneseq
        %v952 = vshrl.u32 %v951, 7
        %v953 = vsub.s32 0, %v952
        %v954 = vrot.slane %v937, %v953
        %v955 = vlaneseq
        %v956 = vshrl.u32 %v955, 7
        %v957 = vsub.s32 0, %v956
        %v958 = vrot.slane %v938, %v957
        %v963 = vmul.f32 %v931, %v946
        %v964 = vmul.f32 %v932, %v950
        %v965 = vmul.f32 %v933, %v954
        %v966 = vmul.f32 %v934, %v958
        %s967 = scalar_lea.vmem %s3, 4
        %v968 = vld [vmem:[%s967] sm:$0x1]
        %v969 = vld [vmem:[%s967 + $0x1] sm:$0x1]
        %v970 = vld [vmem:[%s967 + $0x2] sm:$0x1]
        %v971 = vld [vmem:[%s967 + $0x3] sm:$0x1]
        %v976 = vlaneseq
        %v977 = vshrl.u32 %v976, 7
        %v978 = vsub.s32 0, %v977
        %v979 = vrot.slane %v968, %v978
        %v980 = vlaneseq
        %v981 = vshrl.u32 %v980, 7
        %v982 = vsub.s32 0, %v981
        %v983 = vrot.slane %v969, %v982
        %v984 = vlaneseq
        %v985 = vshrl.u32 %v984, 7
        %v986 = vsub.s32 0, %v985
        %v987 = vrot.slane %v970, %v986
        %v988 = vlaneseq
        %v989 = vshrl.u32 %v988, 7
        %v990 = vsub.s32 0, %v989
        %v991 = vrot.slane %v971, %v990
        %v992 = vcombine.high %v979, %v979
        %v994 = vunpack.c.l.s4 1983009808
        %v995 = vunpack.c.0.s8 %v994
        %v996 = vlaneseq
        %v997 = vshrl.u32 %v996, 7
        %v998 = vsub.s32 %v995, %v997
        %v999 = vrot.slane %v979, %v998
        %v1001 = vunpack.c.l.s4 1983009808
        %v1002 = vunpack.c.0.s8 %v1001
        %v1003 = vlaneseq
        %v1004 = vshrl.u32 %v1003, 7
        %v1005 = vsub.s32 %v1002, %v1004
        %v1006 = vrot.slane %v992, %v1005
        %v1007 = vcombine.high %v999, %v999
        %v1008 = vcombine.high %v1006, %v1006
        %v1009 = vcombine.high %v983, %v983
        %v1011 = vunpack.c.l.s4 1983009808
        %v1012 = vunpack.c.0.s8 %v1011
        %v1013 = vlaneseq
        %v1014 = vshrl.u32 %v1013, 7
        %v1015 = vsub.s32 %v1012, %v1014
        %v1016 = vrot.slane %v983, %v1015
        %v1018 = vunpack.c.l.s4 1983009808
        %v1019 = vunpack.c.0.s8 %v1018
        %v1020 = vlaneseq
        %v1021 = vshrl.u32 %v1020, 7
        %v1022 = vsub.s32 %v1019, %v1021
        %v1023 = vrot.slane %v1009, %v1022
        %v1024 = vcombine.high %v1016, %v1016
        %v1025 = vcombine.high %v1023, %v1023
        %v1026 = vcombine.high %v987, %v987
        %v1028 = vunpack.c.l.s4 1983009808
        %v1029 = vunpack.c.0.s8 %v1028
        %v1030 = vlaneseq
        %v1031 = vshrl.u32 %v1030, 7
        %v1032 = vsub.s32 %v1029, %v1031
        %v1033 = vrot.slane %v987, %v1032
        %v1035 = vunpack.c.l.s4 1983009808
        %v1036 = vunpack.c.0.s8 %v1035
        %v1037 = vlaneseq
        %v1038 = vshrl.u32 %v1037, 7
        %v1039 = vsub.s32 %v1036, %v1038
        %v1040 = vrot.slane %v1026, %v1039
        %v1041 = vcombine.high %v1033, %v1033
        %v1042 = vcombine.high %v1040, %v1040
        %v1043 = vcombine.high %v991, %v991
        %v1045 = vunpack.c.l.s4 1983009808
        %v1046 = vunpack.c.0.s8 %v1045
        %v1047 = vlaneseq
        %v1048 = vshrl.u32 %v1047, 7
        %v1049 = vsub.s32 %v1046, %v1048
        %v1050 = vrot.slane %v991, %v1049
        %v1052 = vunpack.c.l.s4 1983009808
        %v1053 = vunpack.c.0.s8 %v1052
        %v1054 = vlaneseq
        %v1055 = vshrl.u32 %v1054, 7
        %v1056 = vsub.s32 %v1053, %v1055
        %v1057 = vrot.slane %v1043, %v1056
        %v1058 = vcombine.high %v1050, %v1050
        %v1059 = vcombine.high %v1057, %v1057
        %v1060 = vrot.slane %v999, 1
        %v1061 = vrot.slane %v1007, 1
        %v1062 = vrot.slane %v1006, 1
        %v1063 = vrot.slane %v1008, 1
        %v1064 = vrot.slane %v1016, 1
        %v1065 = vrot.slane %v1024, 1
        %v1066 = vrot.slane %v1023, 1
        %v1067 = vrot.slane %v1025, 1
        %v1068 = vrot.slane %v1033, 1
        %v1069 = vrot.slane %v1041, 1
        %v1070 = vrot.slane %v1040, 1
        %v1071 = vrot.slane %v1042, 1
        %v1072 = vrot.slane %v1050, 1
        %v1073 = vrot.slane %v1058, 1
        %v1074 = vrot.slane %v1057, 1
        %v1075 = vrot.slane %v1059, 1
        %v1108 = vmul.f32 %v503, %v999
        %v1109 = vmul.f32 %v511, %v1060
        %v1110 = vmul.f32 %v510, %v1007
        %v1111 = vmul.f32 %v512, %v1061
        %v1112 = vmul.f32 %v520, %v1006
        %v1113 = vmul.f32 %v528, %v1062
        %v1114 = vmul.f32 %v527, %v1008
        %v1115 = vmul.f32 %v529, %v1063
        %v1116 = vmul.f32 %v537, %v1016
        %v1117 = vmul.f32 %v545, %v1064
        %v1118 = vmul.f32 %v544, %v1024
        %v1119 = vmul.f32 %v546, %v1065
        %v1120 = vmul.f32 %v554, %v1023
        %v1121 = vmul.f32 %v562, %v1066
        %v1122 = vmul.f32 %v561, %v1025
        %v1123 = vmul.f32 %v563, %v1067
        %v1124 = vmul.f32 %v571, %v1033
        %v1125 = vmul.f32 %v579, %v1068
        %v1126 = vmul.f32 %v578, %v1041
        %v1127 = vmul.f32 %v580, %v1069
        %v1128 = vmul.f32 %v588, %v1040
        %v1129 = vmul.f32 %v596, %v1070
        %v1130 = vmul.f32 %v595, %v1042
        %v1131 = vmul.f32 %v597, %v1071
        %v1132 = vmul.f32 %v605, %v1050
        %v1133 = vmul.f32 %v613, %v1072
        %v1134 = vmul.f32 %v612, %v1058
        %v1135 = vmul.f32 %v614, %v1073
        %v1136 = vmul.f32 %v622, %v1057
        %v1137 = vmul.f32 %v630, %v1074
        %v1138 = vmul.f32 %v629, %v1059
        %v1139 = vmul.f32 %v631, %v1075
        %v1172 = vlaneseq
        %v1173 = vshrl.u32 %v1172, 7
        %v1174 = vsub.s32 0, %v1173
        %v1175 = vrot.slane %v1108, %v1174
        %v1176 = vlaneseq
        %v1177 = vshrl.u32 %v1176, 7
        %v1178 = vsub.s32 0, %v1177
        %v1179 = vrot.slane %v1109, %v1178
        %v1180 = vlaneseq
        %v1181 = vshrl.u32 %v1180, 7
        %v1182 = vsub.s32 0, %v1181
        %v1183 = vrot.slane %v1110, %v1182
        %v1184 = vlaneseq
        %v1185 = vshrl.u32 %v1184, 7
        %v1186 = vsub.s32 0, %v1185
        %v1187 = vrot.slane %v1111, %v1186
        %v1188 = vlaneseq
        %v1189 = vshrl.u32 %v1188, 7
        %v1190 = vsub.s32 0, %v1189
        %v1191 = vrot.slane %v1112, %v1190
        %v1192 = vlaneseq
        %v1193 = vshrl.u32 %v1192, 7
        %v1194 = vsub.s32 0, %v1193
        %v1195 = vrot.slane %v1113, %v1194
        %v1196 = vlaneseq
        %v1197 = vshrl.u32 %v1196, 7
        %v1198 = vsub.s32 0, %v1197
        %v1199 = vrot.slane %v1114, %v1198
        %v1200 = vlaneseq
        %v1201 = vshrl.u32 %v1200, 7
        %v1202 = vsub.s32 0, %v1201
        %v1203 = vrot.slane %v1115, %v1202
        %v1204 = vlaneseq
        %v1205 = vshrl.u32 %v1204, 7
        %v1206 = vsub.s32 0, %v1205
        %v1207 = vrot.slane %v1116, %v1206
        %v1208 = vlaneseq
        %v1209 = vshrl.u32 %v1208, 7
        %v1210 = vsub.s32 0, %v1209
        %v1211 = vrot.slane %v1117, %v1210
        %v1212 = vlaneseq
        %v1213 = vshrl.u32 %v1212, 7
        %v1214 = vsub.s32 0, %v1213
        %v1215 = vrot.slane %v1118, %v1214
        %v1216 = vlaneseq
        %v1217 = vshrl.u32 %v1216, 7
        %v1218 = vsub.s32 0, %v1217
        %v1219 = vrot.slane %v1119, %v1218
        %v1220 = vlaneseq
        %v1221 = vshrl.u32 %v1220, 7
        %v1222 = vsub.s32 0, %v1221
        %v1223 = vrot.slane %v1120, %v1222
        %v1224 = vlaneseq
        %v1225 = vshrl.u32 %v1224, 7
        %v1226 = vsub.s32 0, %v1225
        %v1227 = vrot.slane %v1121, %v1226
        %v1228 = vlaneseq
        %v1229 = vshrl.u32 %v1228, 7
        %v1230 = vsub.s32 0, %v1229
        %v1231 = vrot.slane %v1122, %v1230
        %v1232 = vlaneseq
        %v1233 = vshrl.u32 %v1232, 7
        %v1234 = vsub.s32 0, %v1233
        %v1235 = vrot.slane %v1123, %v1234
        %v1236 = vlaneseq
        %v1237 = vshrl.u32 %v1236, 7
        %v1238 = vsub.s32 0, %v1237
        %v1239 = vrot.slane %v1124, %v1238
        %v1240 = vlaneseq
        %v1241 = vshrl.u32 %v1240, 7
        %v1242 = vsub.s32 0, %v1241
        %v1243 = vrot.slane %v1125, %v1242
        %v1244 = vlaneseq
        %v1245 = vshrl.u32 %v1244, 7
        %v1246 = vsub.s32 0, %v1245
        %v1247 = vrot.slane %v1126, %v1246
        %v1248 = vlaneseq
        %v1249 = vshrl.u32 %v1248, 7
        %v1250 = vsub.s32 0, %v1249
        %v1251 = vrot.slane %v1127, %v1250
        %v1252 = vlaneseq
        %v1253 = vshrl.u32 %v1252, 7
        %v1254 = vsub.s32 0, %v1253
        %v1255 = vrot.slane %v1128, %v1254
        %v1256 = vlaneseq
        %v1257 = vshrl.u32 %v1256, 7
        %v1258 = vsub.s32 0, %v1257
        %v1259 = vrot.slane %v1129, %v1258
        %v1260 = vlaneseq
        %v1261 = vshrl.u32 %v1260, 7
        %v1262 = vsub.s32 0, %v1261
        %v1263 = vrot.slane %v1130, %v1262
        %v1264 = vlaneseq
        %v1265 = vshrl.u32 %v1264, 7
        %v1266 = vsub.s32 0, %v1265
        %v1267 = vrot.slane %v1131, %v1266
        %v1268 = vlaneseq
        %v1269 = vshrl.u32 %v1268, 7
        %v1270 = vsub.s32 0, %v1269
        %v1271 = vrot.slane %v1132, %v1270
        %v1272 = vlaneseq
        %v1273 = vshrl.u32 %v1272, 7
        %v1274 = vsub.s32 0, %v1273
        %v1275 = vrot.slane %v1133, %v1274
        %v1276 = vlaneseq
        %v1277 = vshrl.u32 %v1276, 7
        %v1278 = vsub.s32 0, %v1277
        %v1279 = vrot.slane %v1134, %v1278
        %v1280 = vlaneseq
        %v1281 = vshrl.u32 %v1280, 7
        %v1282 = vsub.s32 0, %v1281
        %v1283 = vrot.slane %v1135, %v1282
        %v1284 = vlaneseq
        %v1285 = vshrl.u32 %v1284, 7
        %v1286 = vsub.s32 0, %v1285
        %v1287 = vrot.slane %v1136, %v1286
        %v1288 = vlaneseq
        %v1289 = vshrl.u32 %v1288, 7
        %v1290 = vsub.s32 0, %v1289
        %v1291 = vrot.slane %v1137, %v1290
        %v1292 = vlaneseq
        %v1293 = vshrl.u32 %v1292, 7
        %v1294 = vsub.s32 0, %v1293
        %v1295 = vrot.slane %v1138, %v1294
        %v1296 = vlaneseq
        %v1297 = vshrl.u32 %v1296, 7
        %v1298 = vsub.s32 0, %v1297
        %v1299 = vrot.slane %v1139, %v1298
        %v1300 = vsel %vm673, %v1179, %v1175
        %v1301 = vsel %vm676, %v1183, %v1300
        %v1302 = vsel %vm679, %v1187, %v1301
        %v1303 = vsel %vm900, %v1191, %v1302
        %v1304 = vsel %vm902, %v1195, %v1303
        %v1305 = vsel %vm904, %v1199, %v1304
        %v1306 = vsel %vm906, %v1203, %v1305
        %v1307 = vsel %vm673, %v1211, %v1207
        %v1308 = vsel %vm676, %v1215, %v1307
        %v1309 = vsel %vm679, %v1219, %v1308
        %v1310 = vsel %vm900, %v1223, %v1309
        %v1311 = vsel %vm902, %v1227, %v1310
        %v1312 = vsel %vm904, %v1231, %v1311
        %v1313 = vsel %vm906, %v1235, %v1312
        %v1314 = vsel %vm673, %v1243, %v1239
        %v1315 = vsel %vm676, %v1247, %v1314
        %v1316 = vsel %vm679, %v1251, %v1315
        %v1317 = vsel %vm900, %v1255, %v1316
        %v1318 = vsel %vm902, %v1259, %v1317
        %v1319 = vsel %vm904, %v1263, %v1318
        %v1320 = vsel %vm906, %v1267, %v1319
        %v1321 = vsel %vm673, %v1275, %v1271
        %v1322 = vsel %vm676, %v1279, %v1321
        %v1323 = vsel %vm679, %v1283, %v1322
        %v1324 = vsel %vm900, %v1287, %v1323
        %v1325 = vsel %vm902, %v1291, %v1324
        %v1326 = vsel %vm904, %v1295, %v1325
        %v1327 = vsel %vm906, %v1299, %v1326
        %v1332 = vadd.f32 %v963, %v1306
        %v1333 = vadd.f32 %v964, %v1313
        %v1334 = vadd.f32 %v965, %v1320
        %v1335 = vadd.f32 %v966, %v1327
        %s1336 = scalar_lea.vmem %s3, 8
        %v1337 = vld [vmem:[%s1336] sm:$0x1]
        %v1338 = vld [vmem:[%s1336 + $0x1] sm:$0x1]
        %v1339 = vld [vmem:[%s1336 + $0x2] sm:$0x1]
        %v1340 = vld [vmem:[%s1336 + $0x3] sm:$0x1]
        %v1345 = vlaneseq
        %v1346 = vshrl.u32 %v1345, 7
        %v1347 = vsub.s32 0, %v1346
        %v1348 = vrot.slane %v1337, %v1347
        %v1349 = vlaneseq
        %v1350 = vshrl.u32 %v1349, 7
        %v1351 = vsub.s32 0, %v1350
        %v1352 = vrot.slane %v1338, %v1351
        %v1353 = vlaneseq
        %v1354 = vshrl.u32 %v1353, 7
        %v1355 = vsub.s32 0, %v1354
        %v1356 = vrot.slane %v1339, %v1355
        %v1357 = vlaneseq
        %v1358 = vshrl.u32 %v1357, 7
        %v1359 = vsub.s32 0, %v1358
        %v1360 = vrot.slane %v1340, %v1359
        %v1361 = vcombine.high %v1348, %v1348
        %v1363 = vunpack.c.l.s4 1983009808
        %v1364 = vunpack.c.0.s8 %v1363
        %v1365 = vlaneseq
        %v1366 = vshrl.u32 %v1365, 7
        %v1367 = vsub.s32 %v1364, %v1366
        %v1368 = vrot.slane %v1348, %v1367
        %v1370 = vunpack.c.l.s4 1983009808
        %v1371 = vunpack.c.0.s8 %v1370
        %v1372 = vlaneseq
        %v1373 = vshrl.u32 %v1372, 7
        %v1374 = vsub.s32 %v1371, %v1373
        %v1375 = vrot.slane %v1361, %v1374
        %v1376 = vcombine.high %v1368, %v1368
        %v1377 = vcombine.high %v1375, %v1375
        %v1378 = vcombine.high %v1352, %v1352
        %v1380 = vunpack.c.l.s4 1983009808
        %v1381 = vunpack.c.0.s8 %v1380
        %v1382 = vlaneseq
        %v1383 = vshrl.u32 %v1382, 7
        %v1384 = vsub.s32 %v1381, %v1383
        %v1385 = vrot.slane %v1352, %v1384
        %v1387 = vunpack.c.l.s4 1983009808
        %v1388 = vunpack.c.0.s8 %v1387
        %v1389 = vlaneseq
        %v1390 = vshrl.u32 %v1389, 7
        %v1391 = vsub.s32 %v1388, %v1390
        %v1392 = vrot.slane %v1378, %v1391
        %v1393 = vcombine.high %v1385, %v1385
        %v1394 = vcombine.high %v1392, %v1392
        %v1395 = vcombine.high %v1356, %v1356
        %v1397 = vunpack.c.l.s4 1983009808
        %v1398 = vunpack.c.0.s8 %v1397
        %v1399 = vlaneseq
        %v1400 = vshrl.u32 %v1399, 7
        %v1401 = vsub.s32 %v1398, %v1400
        %v1402 = vrot.slane %v1356, %v1401
        %v1404 = vunpack.c.l.s4 1983009808
        %v1405 = vunpack.c.0.s8 %v1404
        %v1406 = vlaneseq
        %v1407 = vshrl.u32 %v1406, 7
        %v1408 = vsub.s32 %v1405, %v1407
        %v1409 = vrot.slane %v1395, %v1408
        %v1410 = vcombine.high %v1402, %v1402
        %v1411 = vcombine.high %v1409, %v1409
        %v1412 = vcombine.high %v1360, %v1360
        %v1414 = vunpack.c.l.s4 1983009808
        %v1415 = vunpack.c.0.s8 %v1414
        %v1416 = vlaneseq
        %v1417 = vshrl.u32 %v1416, 7
        %v1418 = vsub.s32 %v1415, %v1417
        %v1419 = vrot.slane %v1360, %v1418
        %v1421 = vunpack.c.l.s4 1983009808
        %v1422 = vunpack.c.0.s8 %v1421
        %v1423 = vlaneseq
        %v1424 = vshrl.u32 %v1423, 7
        %v1425 = vsub.s32 %v1422, %v1424
        %v1426 = vrot.slane %v1412, %v1425
        %v1427 = vcombine.high %v1419, %v1419
        %v1428 = vcombine.high %v1426, %v1426
        %v1429 = vrot.slane %v1368, 7
        %v1430 = vrot.slane %v1376, 7
        %v1431 = vrot.slane %v1375, 7
        %v1432 = vrot.slane %v1377, 7
        %v1433 = vrot.slane %v1385, 7
        %v1434 = vrot.slane %v1393, 7
        %v1435 = vrot.slane %v1392, 7
        %v1436 = vrot.slane %v1394, 7
        %v1437 = vrot.slane %v1402, 7
        %v1438 = vrot.slane %v1410, 7
        %v1439 = vrot.slane %v1409, 7
        %v1440 = vrot.slane %v1411, 7
        %v1441 = vrot.slane %v1419, 7
        %v1442 = vrot.slane %v1427, 7
        %v1443 = vrot.slane %v1426, 7
        %v1444 = vrot.slane %v1428, 7
        %v1477 = vmul.f32 %v503, %v1429
        %v1478 = vmul.f32 %v511, %v1368
        %v1479 = vmul.f32 %v510, %v1430
        %v1480 = vmul.f32 %v512, %v1376
        %v1481 = vmul.f32 %v520, %v1431
        %v1482 = vmul.f32 %v528, %v1375
        %v1483 = vmul.f32 %v527, %v1432
        %v1484 = vmul.f32 %v529, %v1377
        %v1485 = vmul.f32 %v537, %v1433
        %v1486 = vmul.f32 %v545, %v1385
        %v1487 = vmul.f32 %v544, %v1434
        %v1488 = vmul.f32 %v546, %v1393
        %v1489 = vmul.f32 %v554, %v1435
        %v1490 = vmul.f32 %v562, %v1392
        %v1491 = vmul.f32 %v561, %v1436
        %v1492 = vmul.f32 %v563, %v1394
        %v1493 = vmul.f32 %v571, %v1437
        %v1494 = vmul.f32 %v579, %v1402
        %v1495 = vmul.f32 %v578, %v1438
        %v1496 = vmul.f32 %v580, %v1410
        %v1497 = vmul.f32 %v588, %v1439
        %v1498 = vmul.f32 %v596, %v1409
        %v1499 = vmul.f32 %v595, %v1440
        %v1500 = vmul.f32 %v597, %v1411
        %v1501 = vmul.f32 %v605, %v1441
        %v1502 = vmul.f32 %v613, %v1419
        %v1503 = vmul.f32 %v612, %v1442
        %v1504 = vmul.f32 %v614, %v1427
        %v1505 = vmul.f32 %v622, %v1443
        %v1506 = vmul.f32 %v630, %v1426
        %v1507 = vmul.f32 %v629, %v1444
        %v1508 = vmul.f32 %v631, %v1428
        %v1541 = vlaneseq
        %v1542 = vshrl.u32 %v1541, 7
        %v1543 = vsub.s32 1, %v1542
        %v1544 = vrot.slane %v1477, %v1543
        %v1545 = vlaneseq
        %v1546 = vshrl.u32 %v1545, 7
        %v1547 = vsub.s32 1, %v1546
        %v1548 = vrot.slane %v1478, %v1547
        %v1549 = vlaneseq
        %v1550 = vshrl.u32 %v1549, 7
        %v1551 = vsub.s32 1, %v1550
        %v1552 = vrot.slane %v1479, %v1551
        %v1553 = vlaneseq
        %v1554 = vshrl.u32 %v1553, 7
        %v1555 = vsub.s32 1, %v1554
        %v1556 = vrot.slane %v1480, %v1555
        %v1557 = vlaneseq
        %v1558 = vshrl.u32 %v1557, 7
        %v1559 = vsub.s32 1, %v1558
        %v1560 = vrot.slane %v1481, %v1559
        %v1561 = vlaneseq
        %v1562 = vshrl.u32 %v1561, 7
        %v1563 = vsub.s32 1, %v1562
        %v1564 = vrot.slane %v1482, %v1563
        %v1565 = vlaneseq
        %v1566 = vshrl.u32 %v1565, 7
        %v1567 = vsub.s32 1, %v1566
        %v1568 = vrot.slane %v1483, %v1567
        %v1569 = vlaneseq
        %v1570 = vshrl.u32 %v1569, 7
        %v1571 = vsub.s32 1, %v1570
        %v1572 = vrot.slane %v1484, %v1571
        %v1573 = vlaneseq
        %v1574 = vshrl.u32 %v1573, 7
        %v1575 = vsub.s32 1, %v1574
        %v1576 = vrot.slane %v1485, %v1575
        %v1577 = vlaneseq
        %v1578 = vshrl.u32 %v1577, 7
        %v1579 = vsub.s32 1, %v1578
        %v1580 = vrot.slane %v1486, %v1579
        %v1581 = vlaneseq
        %v1582 = vshrl.u32 %v1581, 7
        %v1583 = vsub.s32 1, %v1582
        %v1584 = vrot.slane %v1487, %v1583
        %v1585 = vlaneseq
        %v1586 = vshrl.u32 %v1585, 7
        %v1587 = vsub.s32 1, %v1586
        %v1588 = vrot.slane %v1488, %v1587
        %v1589 = vlaneseq
        %v1590 = vshrl.u32 %v1589, 7
        %v1591 = vsub.s32 1, %v1590
        %v1592 = vrot.slane %v1489, %v1591
        %v1593 = vlaneseq
        %v1594 = vshrl.u32 %v1593, 7
        %v1595 = vsub.s32 1, %v1594
        %v1596 = vrot.slane %v1490, %v1595
        %v1597 = vlaneseq
        %v1598 = vshrl.u32 %v1597, 7
        %v1599 = vsub.s32 1, %v1598
        %v1600 = vrot.slane %v1491, %v1599
        %v1601 = vlaneseq
        %v1602 = vshrl.u32 %v1601, 7
        %v1603 = vsub.s32 1, %v1602
        %v1604 = vrot.slane %v1492, %v1603
        %v1605 = vlaneseq
        %v1606 = vshrl.u32 %v1605, 7
        %v1607 = vsub.s32 1, %v1606
        %v1608 = vrot.slane %v1493, %v1607
        %v1609 = vlaneseq
        %v1610 = vshrl.u32 %v1609, 7
        %v1611 = vsub.s32 1, %v1610
        %v1612 = vrot.slane %v1494, %v1611
        %v1613 = vlaneseq
        %v1614 = vshrl.u32 %v1613, 7
        %v1615 = vsub.s32 1, %v1614
        %v1616 = vrot.slane %v1495, %v1615
        %v1617 = vlaneseq
        %v1618 = vshrl.u32 %v1617, 7
        %v1619 = vsub.s32 1, %v1618
        %v1620 = vrot.slane %v1496, %v1619
        %v1621 = vlaneseq
        %v1622 = vshrl.u32 %v1621, 7
        %v1623 = vsub.s32 1, %v1622
        %v1624 = vrot.slane %v1497, %v1623
        %v1625 = vlaneseq
        %v1626 = vshrl.u32 %v1625, 7
        %v1627 = vsub.s32 1, %v1626
        %v1628 = vrot.slane %v1498, %v1627
        %v1629 = vlaneseq
        %v1630 = vshrl.u32 %v1629, 7
        %v1631 = vsub.s32 1, %v1630
        %v1632 = vrot.slane %v1499, %v1631
        %v1633 = vlaneseq
        %v1634 = vshrl.u32 %v1633, 7
        %v1635 = vsub.s32 1, %v1634
        %v1636 = vrot.slane %v1500, %v1635
        %v1637 = vlaneseq
        %v1638 = vshrl.u32 %v1637, 7
        %v1639 = vsub.s32 1, %v1638
        %v1640 = vrot.slane %v1501, %v1639
        %v1641 = vlaneseq
        %v1642 = vshrl.u32 %v1641, 7
        %v1643 = vsub.s32 1, %v1642
        %v1644 = vrot.slane %v1502, %v1643
        %v1645 = vlaneseq
        %v1646 = vshrl.u32 %v1645, 7
        %v1647 = vsub.s32 1, %v1646
        %v1648 = vrot.slane %v1503, %v1647
        %v1649 = vlaneseq
        %v1650 = vshrl.u32 %v1649, 7
        %v1651 = vsub.s32 1, %v1650
        %v1652 = vrot.slane %v1504, %v1651
        %v1653 = vlaneseq
        %v1654 = vshrl.u32 %v1653, 7
        %v1655 = vsub.s32 1, %v1654
        %v1656 = vrot.slane %v1505, %v1655
        %v1657 = vlaneseq
        %v1658 = vshrl.u32 %v1657, 7
        %v1659 = vsub.s32 1, %v1658
        %v1660 = vrot.slane %v1506, %v1659
        %v1661 = vlaneseq
        %v1662 = vshrl.u32 %v1661, 7
        %v1663 = vsub.s32 1, %v1662
        %v1664 = vrot.slane %v1507, %v1663
        %v1665 = vlaneseq
        %v1666 = vshrl.u32 %v1665, 7
        %v1667 = vsub.s32 1, %v1666
        %v1668 = vrot.slane %v1508, %v1667
        %v1669 = vsel %vm673, %v1548, %v1544
        %v1670 = vsel %vm676, %v1552, %v1669
        %v1671 = vsel %vm679, %v1556, %v1670
        %v1672 = vsel %vm900, %v1560, %v1671
        %v1673 = vsel %vm902, %v1564, %v1672
        %v1674 = vsel %vm904, %v1568, %v1673
        %v1675 = vsel %vm906, %v1572, %v1674
        %v1676 = vsel %vm673, %v1580, %v1576
        %v1677 = vsel %vm676, %v1584, %v1676
        %v1678 = vsel %vm679, %v1588, %v1677
        %v1679 = vsel %vm900, %v1592, %v1678
        %v1680 = vsel %vm902, %v1596, %v1679
        %v1681 = vsel %vm904, %v1600, %v1680
        %v1682 = vsel %vm906, %v1604, %v1681
        %v1683 = vsel %vm673, %v1612, %v1608
        %v1684 = vsel %vm676, %v1616, %v1683
        %v1685 = vsel %vm679, %v1620, %v1684
        %v1686 = vsel %vm900, %v1624, %v1685
        %v1687 = vsel %vm902, %v1628, %v1686
        %v1688 = vsel %vm904, %v1632, %v1687
        %v1689 = vsel %vm906, %v1636, %v1688
        %v1690 = vsel %vm673, %v1644, %v1640
        %v1691 = vsel %vm676, %v1648, %v1690
        %v1692 = vsel %vm679, %v1652, %v1691
        %v1693 = vsel %vm900, %v1656, %v1692
        %v1694 = vsel %vm902, %v1660, %v1693
        %v1695 = vsel %vm904, %v1664, %v1694
        %v1696 = vsel %vm906, %v1668, %v1695
        %v1701 = vadd.f32 %v1332, %v1675
        %v1702 = vadd.f32 %v1333, %v1682
        %v1703 = vadd.f32 %v1334, %v1689
        %v1704 = vadd.f32 %v1335, %v1696
        %1709 = vrot.lane.b32.xlu0 %v1701, 120
        %v1710 = vpop.permute.xlu0 %1709
        %1711 = vrot.lane.b32.xlu0 %v1702, 120
        %v1712 = vpop.permute.xlu0 %1711
        %1713 = vrot.lane.b32.xlu0 %v1703, 120
        %v1714 = vpop.permute.xlu0 %1713
        %1715 = vrot.lane.b32.xlu0 %v1704, 120
        %v1716 = vpop.permute.xlu0 %1715
        %v1721 = vadd.f32 %v1701, %v1710
        %v1722 = vadd.f32 %v1702, %v1712
        %v1723 = vadd.f32 %v1703, %v1714
        %v1724 = vadd.f32 %v1704, %v1716
        %1725 = vrot.lane.b32.xlu0 %v1701, 112
        %v1726 = vpop.permute.xlu0 %1725
        %1727 = vrot.lane.b32.xlu0 %v1702, 112
        %v1728 = vpop.permute.xlu0 %1727
        %1729 = vrot.lane.b32.xlu0 %v1703, 112
        %v1730 = vpop.permute.xlu0 %1729
        %1731 = vrot.lane.b32.xlu0 %v1704, 112
        %v1732 = vpop.permute.xlu0 %1731
        %v1737 = vadd.f32 %v1721, %v1726
        %v1738 = vadd.f32 %v1722, %v1728
        %v1739 = vadd.f32 %v1723, %v1730
        %v1740 = vadd.f32 %v1724, %v1732
        %v1741 = vcombine.low %v1737, %v1739
        %v1742 = vcombine.high %v1737, %v1739
        %v1744 = vunpack.c.l.s4 1983009808
        %v1745 = vunpack.c.0.s8 %v1744
        %v1746 = vlaneseq
        %v1747 = vshrl.u32 %v1746, 7
        %v1748 = vsub.s32 %v1745, %v1747
        %v1749 = vrot.slane %v1741, %v1748
        %v1751 = vunpack.c.l.s4 1983009808
        %v1752 = vunpack.c.0.s8 %v1751
        %v1753 = vlaneseq
        %v1754 = vshrl.u32 %v1753, 7
        %v1755 = vsub.s32 %v1752, %v1754
        %v1756 = vrot.slane %v1742, %v1755
        %v1757 = vcombine.low %v1738, %v1740
        %v1758 = vcombine.high %v1738, %v1740
        %v1760 = vunpack.c.l.s4 1983009808
        %v1761 = vunpack.c.0.s8 %v1760
        %v1762 = vlaneseq
        %v1763 = vshrl.u32 %v1762, 7
        %v1764 = vsub.s32 %v1761, %v1763
        %v1765 = vrot.slane %v1757, %v1764
        %v1767 = vunpack.c.l.s4 1983009808
        %v1768 = vunpack.c.0.s8 %v1767
        %v1769 = vlaneseq
        %v1770 = vshrl.u32 %v1769, 7
        %v1771 = vsub.s32 %v1768, %v1770
        %v1772 = vrot.slane %v1758, %v1771
        %v1773 = vcombine.low %v1749, %v1765
        %v1774 = vcombine.high %v1749, %v1765
        %v1776 = vunpack.c.l.s4 1934713408
        %v1777 = vunpack.c.0.s8 %v1776
        %v1778 = vlaneseq
        %v1779 = vshrl.u32 %v1778, 7
        %v1780 = vsub.s32 %v1777, %v1779
        %v1781 = vrot.slane %v1773, %v1780
        %v1783 = vunpack.c.l.s4 1934713408
        %v1784 = vunpack.c.0.s8 %v1783
        %v1785 = vlaneseq
        %v1786 = vshrl.u32 %v1785, 7
        %v1787 = vsub.s32 %v1784, %v1786
        %v1788 = vrot.slane %v1774, %v1787
        %v1789 = vcombine.low %v1756, %v1772
        %v1790 = vcombine.high %v1756, %v1772
        %v1792 = vunpack.c.l.s4 1934713408
        %v1793 = vunpack.c.0.s8 %v1792
        %v1794 = vlaneseq
        %v1795 = vshrl.u32 %v1794, 7
        %v1796 = vsub.s32 %v1793, %v1795
        %v1797 = vrot.slane %v1789, %v1796
        %v1799 = vunpack.c.l.s4 1934713408
        %v1800 = vunpack.c.0.s8 %v1799
        %v1801 = vlaneseq
        %v1802 = vshrl.u32 %v1801, 7
        %v1803 = vsub.s32 %v1800, %v1802
        %v1804 = vrot.slane %v1790, %v1803
        %v1805 = vcombine.high %v1781, 0.0
        %v1806 = vcombine.high %v1788, 0.0
        %v1807 = vcombine.high %v1797, 0.0
        %v1808 = vcombine.high %v1804, 0.0
        %1810 = vrot.lane.b32.xlu0 %v1805, 8
        %v1811 = vpop.permute.xlu0 %1810
        %1814 = vrot.lane.b32.xlu0 %v1788, 16
        %v1815 = vpop.permute.xlu0 %1814
        %1818 = vrot.lane.b32.xlu0 %v1806, 24
        %v1819 = vpop.permute.xlu0 %1818
        %1822 = vrot.lane.b32.xlu0 %v1797, 32
        %v1823 = vpop.permute.xlu0 %1822
        %1826 = vrot.lane.b32.xlu0 %v1807, 40
        %v1827 = vpop.permute.xlu0 %1826
        %1830 = vrot.lane.b32.xlu0 %v1804, 48
        %v1831 = vpop.permute.xlu0 %1830
        %1834 = vrot.lane.b32.xlu0 %v1808, 56
        %v1835 = vpop.permute.xlu0 %1834
        %vm1837 = vcmask 64512
        %v1838 = vsel %vm1837, %v1781, %v1811
        %v1839 = vsel %vm358, %v1838, %v1815
        %vm1840 = vcmask 195584
        %v1841 = vsel %vm1840, %v1839, %v1819
        %vm1842 = vcmask 261120
        %v1843 = vsel %vm1842, %v1841, %v1823
        %vm1844 = vcmask 326656
        %v1845 = vsel %vm1844, %v1843, %v1827
        %vm1846 = vcmask 392192
        %v1847 = vsel %vm1846, %v1845, %v1831
        %vm1848 = vcmask 457728
        %v1849 = vsel %vm1848, %v1847, %v1835
        %v1850 = vld [vmem:[%s4] sm:$0xff]
        %v1851 = vld [vmem:[%s5] sm:$0xff]
        %1853 = vset.pattern.permute.xlu0 0
        %1854 = vperm.xlu0 %1853, %v1851
        %v1855 = vpop.permute.xlu0 %1854
        %vm1857 = vcmask 31744
        %v1859 = vsel %vm1857, %v1850, 0
        %vm1861 = vcmask 1043456
        %v1863 = vsel %vm1861, %v1849, 0
        %1865 = vmatprep.subr.mxu0 0.0
        %1866 = vmatpush1.msra.mxu0 %v1863
        %1867 = vmatprep.subr.mxu0 0.0
        %1868 = vmatpush1.msra.mxu0 0.0
        %1869 = vmatprep.subr.mxu0 0.0
        %1870 = vmatpush1.msra.mxu0 0.0
        %1871 = vmatprep.subr.mxu0 0.0
        %1872 = vmatpush1.msra.mxu0 0.0
        %1873 = vmatprep.subr.mxu0 0.0
        %1874 = vmatpush1.msra.mxu0 0.0
        %1875 = vmatprep.subr.mxu0 0.0
        %1876 = vmatpush1.msra.mxu0 0.0
        %1877 = vmatprep.subr.mxu0 0.0
        %1878 = vmatpush1.msra.mxu0 0.0
        %1879 = vmatprep.subr.mxu0 0.0
        %1880 = vmatpush1.msra.mxu0 0.0
        %1881 = vmatprep.subr.mxu0 0.0
        %1882 = vmatpush1.msra.mxu0 0.0
        %1883 = vmatprep.subr.mxu0 0.0
        %1884 = vmatpush1.msra.mxu0 0.0
        %1885 = vmatprep.subr.mxu0 0.0
        %1886 = vmatpush1.msra.mxu0 0.0
        %1887 = vmatprep.subr.mxu0 0.0
        %1888 = vmatpush1.msra.mxu0 0.0
        %1889 = vmatprep.subr.mxu0 0.0
        %1890 = vmatpush1.msra.mxu0 0.0
        %1891 = vmatprep.subr.mxu0 0.0
        %1892 = vmatpush1.msra.mxu0 0.0
        %1893 = vmatprep.subr.mxu0 0.0
        %1894 = vmatpush1.msra.mxu0 0.0
        %1895 = vmatprep.subr.mxu0 0.0
        %1896 = vmatpush1.msra.mxu0 0.0
        %1897 = vmatprep.subr.mxu0 0.0
        %1898 = vmatpush1.msra.mxu0 0.0
        %1899 = vmatprep.subr.mxu0 0.0
        %1900 = vmatpush1.msra.mxu0 0.0
        %1901 = vmatprep.subr.mxu0 0.0
        %1902 = vmatpush1.msra.mxu0 0.0
        %1903 = vmatprep.subr.mxu0 0.0
        %1904 = vmatpush1.msra.mxu0 0.0
        %1905 = vmatprep.subr.mxu0 0.0
        %1906 = vmatpush1.msra.mxu0 0.0
        %1907 = vmatprep.subr.mxu0 0.0
        %1908 = vmatpush1.msra.mxu0 0.0
        %1909 = vmatprep.subr.mxu0 0.0
        %1910 = vmatpush1.msra.mxu0 0.0
        %1911 = vmatprep.subr.mxu0 0.0
        %1912 = vmatpush1.msra.mxu0 0.0
        %1913 = vmatprep.subr.mxu0 0.0
        %1914 = vmatpush1.msra.mxu0 0.0
        %1915 = vmatprep.subr.mxu0 0.0
        %1916 = vmatpush1.msra.mxu0 0.0
        %1917 = vmatprep.subr.mxu0 0.0
        %1918 = vmatpush1.msra.mxu0 0.0
        %1919 = vmatprep.subr.mxu0 0.0
        %1920 = vmatpush1.msra.mxu0 0.0
        %1921 = vmatprep.subr.mxu0 0.0
        %1922 = vmatpush1.msra.mxu0 0.0
        %1923 = vmatprep.subr.mxu0 0.0
        %1924 = vmatpush1.msra.mxu0 0.0
        %1925 = vmatprep.subr.mxu0 0.0
        %1926 = vmatpush1.msra.mxu0 0.0
        %1927 = vmatprep.subr.mxu0 0.0
        %1928 = vmatpush1.msra.mxu0 0.0
        %1929 = vmatprep.mubr.f32.mxu0 0.0
        %1930 = vmatmul.mubr.f32.gmra.mrb[0].mxu0 %v1859
        %v1931 = vpop.f32.mrb[0].mxu0
        %v1932 = vadd.f32 %v1855, %v1931
        %v1933 = vpop.f32.mrb[0].mxu0
        %1934 = vdwg.mxu0
        %v1935 = vmax.f32 %v1932, 0.0
        %vm1936 = vcmask 523264
        %1937 = vst.msk [vmem:[%s342] sm:$0xff] %vm1936, %v1935
        %s1938 = sand.u32 %s196, 1
        %s1939 = scalar_lea.sflag [#allocation4], %s1938
        %s1940 = sand.u32 %s196, 1
        %s1941 = smul.addr %s1940, 8
        %s1942 = scalar_lea.vmem [#allocation7], %s1941
        // Predicated region
        $region53: #{tpu_custom_call.1} parent=43 // pred_check
          %p1943 = pneg %p206
        $region54: #{tpu_custom_call.1} parent=43 // pred_check_branch
          %1945 = sbr.rel (%p1943) target = $region56
        $region55: #{tpu_custom_call.1} parent=43 // pred_region
          %s1947 = ssub.s32 128, 128
          %1948 = vsyncadd %s1939, %s1947
          %s1949 = sadd.s32 %s31, %s30
          %s1950 = smul.addr %s1949, 128
          %s1951 = scalar_lea.hbm %s6, %s1950
          %s1953 = sshll.u32 %s1942, 4
          %s1954 = int_to_ptr.vmem [resolvable:$true] %s1953
          %1956 = dma.vmem_to_hbm [thread:$0]  %s1954, 128, %s1951, %s1939
        $region56: #{tpu_custom_call.1} parent=43 // pred_fallthru
          _
      $region44: #{tpu_custom_call.1} parent=5 // pred_fallthru
        _
      %p1957 = scmp.le.s32.totalorder 2, %s21
      // Predicated region
      $region57: #{tpu_custom_call.1} parent=5 // pred_check
        %p1958 = pneg %p1957
      $region58: #{tpu_custom_call.1} parent=5 // pred_check_branch
        %1960 = sbr.rel (%p1958) target = $region60
      $region59: #{tpu_custom_call.1} parent=5 // pred_region
        %s1961 = ssub.s32 %s21, 2
        // Predicated region
        $region61: #{tpu_custom_call.1} parent=59 // pred_check
          %p1962 = pneg %p212
        $region62: #{tpu_custom_call.1} parent=59 // pred_check_branch
          %1964 = sbr.rel (%p1962) target = $region64
        $region63: #{tpu_custom_call.1} parent=59 // pred_region
          %s1965 = sand.u32 %s197, 1
          %s1966 = scalar_lea.sflag [#allocation4], %s1965
          %s1967 = sand.u32 %s197, 1
          %s1968 = smul.addr %s1967, 8
          %s1969 = scalar_lea.vmem [#allocation7], %s1968
          %1970 = dma.done %s1966, 128
        $region64: #{tpu_custom_call.1} parent=59 // pred_fallthru
          _
      $region60: #{tpu_custom_call.1} parent=5 // pred_fallthru
        _
    $region6: #{tpu_custom_call.1} parent=1 // loop_footer
      %s25 = sadd.s32 1, %s21
    $region7: #{tpu_custom_call.1} parent=1 // loop_footer_branch
      %20 = sbr.rel target = $region3
    $region8: #{tpu_custom_call.1} parent=1 // loop_exit
      _
    %1971 = vsyncpa [#allocation3], 1
    %s1972 = scalar_lea.sflag [#allocation3], 1
    %1973 = vsyncpa %s1972, 1
    %1974 = vsyncpa [#allocation6], 1
    %s1975 = scalar_lea.sflag [#allocation6], 1
    %1976 = vsyncpa %s1975, 1
    %1977 = vsyncpa [#allocation4], 1
    %s1978 = scalar_lea.sflag [#allocation4], 1
    %1979 = vsyncpa %s1978, 1

</llo_original>
